<compile_context>
chip_gen: v5e
topology: v5e:2x2
jax: 0.10.0
libtpu: 0.0.40
codegen_flags: <defaults>
</compile_context>

<pallas_src>
import functools

import jax
import jax.numpy as jnp
from jax import lax
from jax.experimental import pallas as pl
from jax.experimental.pallas import tpu as pltpu


# -------------------- problem sizes (small, deterministic) --------------------
VOCAB = 50
EMBED = 32
ENC_H = 32
DEC_H = 32
PAD_IDX = 0
SEQ_T = 8
BATCH = 2


# ------------------------------ Pallas kernel ---------------------------------
def _encoder_kernel(tok_ref, len_ref, wpair_ref, whh_ref, bhh_ref, wfc_ref, bfc_ref,
                    out_ref, hid_ref, gx_ref, *, vocab):
    # tok_ref : (T*B, 2) int32   col0 = token at t=i (fwd), col1 = token at t=T-1-i (bwd)
    # len_ref : (B, 1)   f32     sequence lengths
    # wpair_ref: (VP, 6H) f32    per-token gate preacts (embed @ W_ih + b_ih), gate-major, paired
    # whh_ref : (2H, 6H) f32     block-structured recurrent weights, gate-major columns
    # bhh_ref : (1, 6H)  f32
    # wfc_ref : (2H, D)  f32 ; bfc_ref : (1, D) f32
    # out_ref : (T, B*2H) f32    lane-dense fused bidirectional outputs
    # hid_ref : (B, D)   f32
    # gx_ref  : (T*B, 6H) f32    VMEM scratch for input-side gate pre-activations
    TB = tok_ref.shape[0]
    B = len_ref.shape[0]
    T = TB // B
    H2 = whh_ref.shape[0]
    H = H2 // 2
    VP = wpair_ref.shape[0]                     # 2*vocab rounded up to a multiple of 128

    # ---- fused embedding gather + input projection + bias: ONE one-hot MXU pass ----
    col = lax.broadcasted_iota(jnp.int32, (TB, VP), 1)
    tok_f = tok_ref[:, 0:1]                     # fwd-direction token ids
    tok_b = tok_ref[:, 1:2]                     # bwd-direction token ids
    onehot = jnp.logical_or(col == tok_f, col == tok_b + vocab).astype(jnp.float32)
    gx_ref[...] = jnp.dot(onehot, wpair_ref[...], preferred_element_type=jnp.float32)

    # ---- hoisted invariants (loaded once) ----
    whh = whh_ref[...]                          # (2H, 6H)
    bhh = bhh_ref[...]                          # (1, 6H)
    lens = jnp.broadcast_to(len_ref[...], (B, H2))                       # (B, 2H)
    is_bwd = (lax.broadcasted_iota(jnp.int32, (1, H2), 1) >= H).astype(jnp.float32)

    h_cat = jnp.zeros((B, H2), jnp.float32)     # [h_fwd | h_bwd]
    out_vals = []                               # per-iteration masked h_new (B, 2H)

    # ---- fused fwd/bwd recurrence, fully unrolled (T small & static) ----
    for i in range(T):
        tb = T - 1 - i
        gx = gx_ref[pl.ds(i * B, B), :]         # (B, 6H) gate-major: fwd@t=i paired with bwd@t=tb
        gh = jnp.dot(h_cat, whh, preferred_element_type=jnp.float32) + bhh   # (B, 6H)

        rz = jax.nn.sigmoid(gx[:, 0:4 * H] + gh[:, 0:4 * H])                 # [r_f r_b z_f z_b]
        n = jnp.tanh(gx[:, 4 * H:6 * H] + rz[:, 0:2 * H] * gh[:, 4 * H:6 * H])   # [n_f n_b]
        z = rz[:, 2 * H:4 * H]
        h_new = h_cat + (1.0 - z) * (n - h_cat)                              # = (1-z)*n + z*h

        # valid iff t < length; fwd half uses t=i, bwd half uses t=T-1-i
        t_eff = jnp.float32(i) + jnp.float32(tb - i) * is_bwd                # (1, 2H)
        m = t_eff < lens                                                     # (B, 2H) bool
        h_cat = jnp.where(m, h_new, h_cat)                                   # freeze past length
        out_vals.append(jnp.where(m, h_new, 0.0))                            # zero padded steps

    # ---- single lane-dense (T, B*2H) = (8,128) output store ----
    cols = []
    for b in range(B):
        cols.append(jnp.concatenate(
            [out_vals[t][b:b + 1, 0:H] for t in range(T)], axis=0))          # fwd outputs, (T,H)
        cols.append(jnp.concatenate(
            [out_vals[T - 1 - t][b:b + 1, H:H2] for t in range(T)], axis=0))  # bwd outputs, (T,H)
    out_ref[...] = jnp.concatenate(cols, axis=1)

    # ---- decoder-init hidden: tanh(fc([h_fwd_final ; h_bwd_final])) ----
    hid_ref[...] = jnp.tanh(
        jnp.dot(h_cat, wfc_ref[...], preferred_element_type=jnp.float32) + bfc_ref[...])


# -------------------- one-time parameter packing (hoisted out of fwd path) -----
def prepare_params(params):
    H, D, V = ENC_H, DEC_H, VOCAB
    hp = "highest"
    emb = params["embed"].astype(jnp.float32)

    # Per-token input-side gate pre-activations (embedding folded into W_ih), per direction.
    gf = jnp.dot(emb, params["wih_f"].T, precision=hp)      # (V, 3H) in [r z n] order
    gb = jnp.dot(emb, params["wih_b"].T, precision=hp)      # (V, 3H)

    vp = ((2 * V + 127) // 128) * 128                       # pad matmul-K to a lane multiple
    wpair = jnp.zeros((vp, 6 * H), jnp.float32)
    # rows 0:V  -> selected by the forward-direction token (gate-major fwd columns, bias folded)
    wpair = wpair.at[0:V, 0 * H:1 * H].set(gf[:, 0:H] + params["bih_f"][0:H])
    wpair = wpair.at[0:V, 2 * H:3 * H].set(gf[:, H:2 * H] + params["bih_f"][H:2 * H])
    wpair = wpair.at[0:V, 4 * H:5 * H].set(gf[:, 2 * H:3 * H] + params["bih_f"][2 * H:3 * H])
    # rows V:2V -> selected by the backward-direction token (gate-major bwd columns)
    wpair = wpair.at[V:2 * V, 1 * H:2 * H].set(gb[:, 0:H] + params["bih_b"][0:H])
    wpair = wpair.at[V:2 * V, 3 * H:4 * H].set(gb[:, H:2 * H] + params["bih_b"][H:2 * H])
    wpair = wpair.at[V:2 * V, 5 * H:6 * H].set(gb[:, 2 * H:3 * H] + params["bih_b"][2 * H:3 * H])

    # Block-structured recurrent weights, gate-major columns [r_f r_b z_f z_b n_f n_b].
    whh = jnp.zeros((2 * H, 6 * H), jnp.float32)
    whh = whh.at[0:H, 0 * H:1 * H].set(params["whh_f"][0:H].T)
    whh = whh.at[0:H, 2 * H:3 * H].set(params["whh_f"][H:2 * H].T)
    whh = whh.at[0:H, 4 * H:5 * H].set(params["whh_f"][2 * H:3 * H].T)
    whh = whh.at[H:, 1 * H:2 * H].set(params["whh_b"][0:H].T)
    whh = whh.at[H:, 3 * H:4 * H].set(params["whh_b"][H:2 * H].T)
    whh = whh.at[H:, 5 * H:6 * H].set(params["whh_b"][2 * H:3 * H].T)

    bhh = jnp.concatenate([
        params["bhh_f"][0:H], params["bhh_b"][0:H],
        params["bhh_f"][H:2 * H], params["bhh_b"][H:2 * H],
        params["bhh_f"][2 * H:3 * H], params["bhh_b"][2 * H:3 * H]]).reshape(1, 6 * H)

    return {
        "wpair": wpair, "whh": whh, "bhh": bhh,
        "wfc_t": params["wfc"].T.astype(jnp.float32),
        "bfc": params["bfc"].reshape(1, D).astype(jnp.float32),
    }


# ------------------------------ wrapper ---------------------------------------
def encoder_forward(prep, x_tokens, x_lengths):
    """x_tokens: (B, T) int32 ids; x_lengths: (B,) int32 (sorted descending)."""
    B, T = x_tokens.shape
    H, D = ENC_H, DEC_H

    # Only per-call glue: pair fwd/bwd tokens (tiny int ops) and reshape lengths.
    tok_tm = x_tokens.T.astype(jnp.int32)                                  # (T, B)
    tok_pair = jnp.stack([tok_tm, tok_tm[::-1]], axis=-1).reshape(T * B, 2)
    lens = x_lengths.astype(jnp.float32).reshape(B, 1)

    vmem = pl.BlockSpec(memory_space=pltpu.MemorySpace.VMEM)
    kernel = functools.partial(_encoder_kernel, vocab=VOCAB)

    out_flat, hidden = pl.pallas_call(
        kernel,
        out_shape=(jax.ShapeDtypeStruct((T, B * 2 * H), jnp.float32),
                   jax.ShapeDtypeStruct((B, D), jnp.float32)),
        in_specs=[vmem] * 7,
        out_specs=(vmem, vmem),
        scratch_shapes=[pltpu.VMEM((T * B, 6 * H), jnp.float32)],
    )(tok_pair, lens, prep["wpair"], prep["whh"], prep["bhh"], prep["wfc_t"], prep["bfc"])

    return out_flat.reshape(T, B, 2 * H), hidden                           # (T,B,2H), (B,D)


# ------------------------- pure-JAX reference (sanity) -------------------------
def encoder_reference(params, x_tokens, x_lengths):
    B, T = x_tokens.shape
    H = ENC_H
    hp = "highest"
    emb = jnp.take(params["embed"], x_tokens, axis=0)
    emb = jnp.transpose(emb, (1, 0, 2)).astype(jnp.float32)                # (T, B, E)
    lens = x_lengths.astype(jnp.int32)

    def run_dir(wih, whh, bih, bhh, reverse):
        h = jnp.zeros((B, H), jnp.float32)
        out = jnp.zeros((T, B, H), jnp.float32)
        steps = range(T - 1, -1, -1) if reverse else range(T)
        for t in steps:
            x_t = emb[t]
            gx = jnp.dot(x_t, wih.T, precision=hp) + bih
            gh = jnp.dot(h, whh.T, precision=hp) + bhh
            r = jax.nn.sigmoid(gx[:, :H] + gh[:, :H])
            z = jax.nn.sigmoid(gx[:, H:2 * H] + gh[:, H:2 * H])
            n = jnp.tanh(gx[:, 2 * H:] + r * gh[:, 2 * H:])
            h_new = (1.0 - z) * n + z * h
            mask = (t < lens)[:, None]
            h = jnp.where(mask, h_new, h)
            out = out.at[t].set(jnp.where(mask, h_new, 0.0))
        return out, h

    of, hf = run_dir(params["wih_f"], params["whh_f"], params["bih_f"], params["bhh_f"], False)
    ob, hb = run_dir(params["wih_b"], params["whh_b"], params["bih_b"], params["bhh_b"], True)
    outputs = jnp.concatenate([of, ob], axis=-1)
    hidden = jnp.tanh(jnp.dot(jnp.concatenate([hf, hb], axis=-1), params["wfc"].T, precision=hp)
                      + params["bfc"])
    return outputs, hidden


# ------------------------------ params / main ----------------------------------
def init_params(key):
    H, E, D, V = ENC_H, EMBED, DEC_H, VOCAB
    ks = jax.random.split(key, 12)
    s = 1.0 / jnp.sqrt(H)

    def u(k, shape, scale):
        return jax.random.uniform(k, shape, jnp.float32, -scale, scale)

    embed = jax.random.normal(ks[0], (V, E), jnp.float32)
    embed = embed.at[PAD_IDX].set(0.0)                 # padding_idx row is zero
    return {
        "embed": embed,
        "wih_f": u(ks[1], (3 * H, E), s), "whh_f": u(ks[2], (3 * H, H), s),
        "bih_f": u(ks[3], (3 * H,), s),   "bhh_f": u(ks[4], (3 * H,), s),
        "wih_b": u(ks[5], (3 * H, E), s), "whh_b": u(ks[6], (3 * H, H), s),
        "bih_b": u(ks[7], (3 * H,), s),   "bhh_b": u(ks[8], (3 * H,), s),
        "wfc": u(ks[9], (D, 2 * H), 1.0 / jnp.sqrt(2 * H)),
        "bfc": u(ks[10], (D,), 1.0 / jnp.sqrt(2 * H)),
    }


if __name__ == "__main__":
    key = jax.random.PRNGKey(0)
    params = init_params(key)
    prep = prepare_params(params)          # one-time weight packing (hoisted out of fwd path)

    # Token ids (B, T); lengths sorted descending (pack_padded_sequence convention).
    x_lengths = jnp.array([SEQ_T, 5], dtype=jnp.int32)
    tok_key = jax.random.fold_in(key, 123)
    x = jax.random.randint(tok_key, (BATCH, SEQ_T), 1, VOCAB, dtype=jnp.int32)
    t_idx = jnp.arange(SEQ_T)[None, :]
    x = jnp.where(t_idx < x_lengths[:, None], x, PAD_IDX)        # pad past length

    fwd = jax.jit(encoder_forward)
    outputs, hidden = fwd(prep, x, x_lengths)
    jax.block_until_ready((outputs, hidden))

    ref_out, ref_hid = encoder_reference(params, x, x_lengths)
    assert outputs.shape == (SEQ_T, BATCH, 2 * ENC_H)
    assert hidden.shape == (BATCH, DEC_H)
    err_o = float(jnp.max(jnp.abs(outputs - ref_out)))
    err_h = float(jnp.max(jnp.abs(hidden - ref_hid)))
    assert err_o < 1e-4, f"outputs mismatch: {err_o}"
    assert err_h < 1e-4, f"hidden mismatch: {err_h}"

    print("KERNEL_OK")
</pallas_src>

<mosaic_0001>
module attributes {stable_mosaic.version = 11 : i64} {
  func.func @_encoder_kernel(%arg0: memref<16x2xi32, #tpu.memory_space<vmem>>, %arg1: memref<2x1xf32, #tpu.memory_space<vmem>>, %arg2: memref<128x192xf32, #tpu.memory_space<vmem>>, %arg3: memref<64x192xf32, #tpu.memory_space<vmem>>, %arg4: memref<1x192xf32, #tpu.memory_space<vmem>>, %arg5: memref<64x32xf32, #tpu.memory_space<vmem>>, %arg6: memref<1x32xf32, #tpu.memory_space<vmem>>, %arg7: memref<8x128xf32, #tpu.memory_space<vmem>>, %arg8: memref<2x32xf32, #tpu.memory_space<vmem>>, %arg9: memref<16x192xf32, #tpu.memory_space<vmem>>) attributes {dimension_semantics = [], scalar_prefetch = 0 : i64, scratch_operands = 1 : i64, tpu.core_type = #tpu.core_type<tc>} {
    %0 = tpu.iota {dimensions = array<i32: 1>} : vector<16x128xi32>
    %c0 = arith.constant 0 : index
    %c0_0 = arith.constant 0 : index
    %1 = vector.load %arg0[%c0, %c0_0] : memref<16x2xi32, #tpu.memory_space<vmem>>, vector<16x1xi32>
    %c0_1 = arith.constant 0 : index
    %c1 = arith.constant 1 : index
    %2 = vector.load %arg0[%c0_1, %c1] : memref<16x2xi32, #tpu.memory_space<vmem>>, vector<16x1xi32>
    %3 = vector.broadcast %1 : vector<16x1xi32> to vector<16x128xi32>
    %4 = arith.cmpi eq, %0, %3 : vector<16x128xi32>
    %c50_i32 = arith.constant 50 : i32
    %5 = vector.broadcast %c50_i32 : i32 to vector<16x1xi32>
    %6 = arith.addi %2, %5 : vector<16x1xi32>
    %7 = vector.broadcast %6 : vector<16x1xi32> to vector<16x128xi32>
    %8 = arith.cmpi eq, %0, %7 : vector<16x128xi32>
    %9 = arith.ori %4, %8 : vector<16x128xi1>
    %10 = arith.extui %9 : vector<16x128xi1> to vector<16x128xi32>
    %11 = arith.sitofp %10 : vector<16x128xi32> to vector<16x128xf32>
    %c0_2 = arith.constant 0 : index
    %c0_3 = arith.constant 0 : index
    %12 = vector.load %arg2[%c0_2, %c0_3] : memref<128x192xf32, #tpu.memory_space<vmem>>, vector<128x192xf32>
    %cst = arith.constant dense<0.000000e+00> : vector<16x192xf32>
    %13 = tpu.matmul %11, %12, %cst {dimension_numbers = #tpu.dot_dimension_numbers<[1], [0], [0], [1], [0, 0, 1, 1], [], []>} : vector<16x128xf32>, vector<128x192xf32>, vector<16x192xf32> -> vector<16x192xf32>
    %c0_4 = arith.constant 0 : index
    %c0_5 = arith.constant 0 : index
    %14 = vector.load %arg9[%c0_4, %c0_5] : memref<16x192xf32, #tpu.memory_space<vmem>>, vector<16x192xf32>
    tpu.vector_store %arg9[%c0_4, %c0_5], %13 {strides = array<i32>} : memref<16x192xf32, #tpu.memory_space<vmem>>, vector<16x192xf32>,
    %c0_6 = arith.constant 0 : index
    %c0_7 = arith.constant 0 : index
    %15 = vector.load %arg3[%c0_6, %c0_7] : memref<64x192xf32, #tpu.memory_space<vmem>>, vector<64x192xf32>
    %c0_8 = arith.constant 0 : index
    %c0_9 = arith.constant 0 : index
    %16 = vector.load %arg4[%c0_8, %c0_9] : memref<1x192xf32, #tpu.memory_space<vmem>>, vector<1x192xf32>
    %c0_10 = arith.constant 0 : index
    %c0_11 = arith.constant 0 : index
    %17 = vector.load %arg1[%c0_10, %c0_11] : memref<2x1xf32, #tpu.memory_space<vmem>>, vector<2x1xf32>
    %18 = vector.shape_cast %17 : vector<2x1xf32> to vector<2x1xf32>
    %19 = vector.broadcast %18 : vector<2x1xf32> to vector<2x64xf32>
    %20 = tpu.iota {dimensions = array<i32: 1>} : vector<1x64xi32>
    %c32_i32 = arith.constant 32 : i32
    %21 = vector.broadcast %c32_i32 : i32 to vector<1x64xi32>
    %22 = arith.cmpi sge, %20, %21 : vector<1x64xi32>
    %23 = arith.extui %22 : vector<1x64xi1> to vector<1x64xi32>
    %24 = arith.sitofp %23 : vector<1x64xi32> to vector<1x64xf32>
    %cst_12 = arith.constant 0.000000e+00 : f32
    %25 = vector.broadcast %cst_12 : f32 to vector<2x64xf32>
    %c0_13 = arith.constant 0 : index
    %c0_14 = arith.constant 0 : index
    %26 = vector.load %arg9[%c0_13, %c0_14] : memref<16x192xf32, #tpu.memory_space<vmem>>, vector<2x192xf32>
    %cst_15 = arith.constant dense<0.000000e+00> : vector<2x192xf32>
    %27 = tpu.matmul %25, %15, %cst_15 {dimension_numbers = #tpu.dot_dimension_numbers<[1], [0], [0], [1], [0, 0, 1, 1], [], []>} : vector<2x64xf32>, vector<64x192xf32>, vector<2x192xf32> -> vector<2x192xf32>
    %28 = vector.broadcast %16 : vector<1x192xf32> to vector<2x192xf32>
    %29 = arith.addf %27, %28 : vector<2x192xf32>
    %30 = vector.extract_strided_slice %26 {offsets = [0, 0], sizes = [2, 128], strides = [1, 1]} : vector<2x192xf32> to vector<2x128xf32>
    %31 = vector.extract_strided_slice %29 {offsets = [0, 0], sizes = [2, 128], strides = [1, 1]} : vector<2x192xf32> to vector<2x128xf32>
    %32 = arith.addf %30, %31 : vector<2x128xf32>
    %33 = arith.negf %32 : vector<2x128xf32>
    %34 = math.exp %33 : vector<2x128xf32>
    %cst_16 = arith.constant 1.000000e+00 : f32
    %35 = vector.broadcast %cst_16 : f32 to vector<2x128xf32>
    %36 = arith.addf %35, %34 : vector<2x128xf32>
    %37 = arith.divf %35, %36 : vector<2x128xf32>
    %38 = vector.extract_strided_slice %26 {offsets = [0, 128], sizes = [2, 64], strides = [1, 1]} : vector<2x192xf32> to vector<2x64xf32>
    %39 = vector.extract_strided_slice %37 {offsets = [0, 0], sizes = [2, 64], strides = [1, 1]} : vector<2x128xf32> to vector<2x64xf32>
    %40 = vector.extract_strided_slice %29 {offsets = [0, 128], sizes = [2, 64], strides = [1, 1]} : vector<2x192xf32> to vector<2x64xf32>
    %41 = arith.mulf %39, %40 : vector<2x64xf32>
    %42 = arith.addf %38, %41 : vector<2x64xf32>
    %43 = math.tanh %42 : vector<2x64xf32>
    %44 = vector.extract_strided_slice %37 {offsets = [0, 64], sizes = [2, 64], strides = [1, 1]} : vector<2x128xf32> to vector<2x64xf32>
    %cst_17 = arith.constant 1.000000e+00 : f32
    %45 = vector.broadcast %cst_17 : f32 to vector<2x64xf32>
    %46 = arith.subf %45, %44 : vector<2x64xf32>
    %47 = arith.subf %43, %25 : vector<2x64xf32>
    %48 = arith.mulf %46, %47 : vector<2x64xf32>
    %49 = arith.addf %25, %48 : vector<2x64xf32>
    %cst_18 = arith.constant 7.000000e+00 : f32
    %50 = vector.broadcast %cst_18 : f32 to vector<1x64xf32>
    %51 = arith.mulf %50, %24 : vector<1x64xf32>
    %cst_19 = arith.constant 0.000000e+00 : f32
    %52 = vector.broadcast %cst_19 : f32 to vector<1x64xf32>
    %53 = arith.addf %52, %51 : vector<1x64xf32>
    %54 = vector.broadcast %53 : vector<1x64xf32> to vector<2x64xf32>
    %55 = arith.cmpf olt, %54, %19 : vector<2x64xf32>
    %56 = arith.select %55, %49, %25 : vector<2x64xi1>, vector<2x64xf32>
    %cst_20 = arith.constant 0.000000e+00 : f32
    %57 = vector.broadcast %cst_20 : f32 to vector<2x64xf32>
    %58 = arith.select %55, %49, %57 : vector<2x64xi1>, vector<2x64xf32>
    %c2 = arith.constant 2 : index
    %c0_21 = arith.constant 0 : index
    %59 = vector.load %arg9[%c2, %c0_21] : memref<16x192xf32, #tpu.memory_space<vmem>>, vector<2x192xf32>
    %cst_22 = arith.constant dense<0.000000e+00> : vector<2x192xf32>
    %60 = tpu.matmul %56, %15, %cst_22 {dimension_numbers = #tpu.dot_dimension_numbers<[1], [0], [0], [1], [0, 0, 1, 1], [], []>} : vector<2x64xf32>, vector<64x192xf32>, vector<2x192xf32> -> vector<2x192xf32>
    %61 = vector.broadcast %16 : vector<1x192xf32> to vector<2x192xf32>
    %62 = arith.addf %60, %61 : vector<2x192xf32>
    %63 = vector.extract_strided_slice %59 {offsets = [0, 0], sizes = [2, 128], strides = [1, 1]} : vector<2x192xf32> to vector<2x128xf32>
    %64 = vector.extract_strided_slice %62 {offsets = [0, 0], sizes = [2, 128], strides = [1, 1]} : vector<2x192xf32> to vector<2x128xf32>
    %65 = arith.addf %63, %64 : vector<2x128xf32>
    %66 = arith.negf %65 : vector<2x128xf32>
    %67 = math.exp %66 : vector<2x128xf32>
    %cst_23 = arith.constant 1.000000e+00 : f32
    %68 = vector.broadcast %cst_23 : f32 to vector<2x128xf32>
    %69 = arith.addf %68, %67 : vector<2x128xf32>
    %70 = arith.divf %68, %69 : vector<2x128xf32>
    %71 = vector.extract_strided_slice %59 {offsets = [0, 128], sizes = [2, 64], strides = [1, 1]} : vector<2x192xf32> to vector<2x64xf32>
    %72 = vector.extract_strided_slice %70 {offsets = [0, 0], sizes = [2, 64], strides = [1, 1]} : vector<2x128xf32> to vector<2x64xf32>
    %73 = vector.extract_strided_slice %62 {offsets = [0, 128], sizes = [2, 64], strides = [1, 1]} : vector<2x192xf32> to vector<2x64xf32>
    %74 = arith.mulf %72, %73 : vector<2x64xf32>
    %75 = arith.addf %71, %74 : vector<2x64xf32>
    %76 = math.tanh %75 : vector<2x64xf32>
    %77 = vector.extract_strided_slice %70 {offsets = [0, 64], sizes = [2, 64], strides = [1, 1]} : vector<2x128xf32> to vector<2x64xf32>
    %cst_24 = arith.constant 1.000000e+00 : f32
    %78 = vector.broadcast %cst_24 : f32 to vector<2x64xf32>
    %79 = arith.subf %78, %77 : vector<2x64xf32>
    %80 = arith.subf %76, %56 : vector<2x64xf32>
    %81 = arith.mulf %79, %80 : vector<2x64xf32>
    %82 = arith.addf %56, %81 : vector<2x64xf32>
    %cst_25 = arith.constant 5.000000e+00 : f32
    %83 = vector.broadcast %cst_25 : f32 to vector<1x64xf32>
    %84 = arith.mulf %83, %24 : vector<1x64xf32>
    %cst_26 = arith.constant 1.000000e+00 : f32
    %85 = vector.broadcast %cst_26 : f32 to vector<1x64xf32>
    %86 = arith.addf %85, %84 : vector<1x64xf32>
    %87 = vector.broadcast %86 : vector<1x64xf32> to vector<2x64xf32>
    %88 = arith.cmpf olt, %87, %19 : vector<2x64xf32>
    %89 = arith.select %88, %82, %56 : vector<2x64xi1>, vector<2x64xf32>
    %cst_27 = arith.constant 0.000000e+00 : f32
    %90 = vector.broadcast %cst_27 : f32 to vector<2x64xf32>
    %91 = arith.select %88, %82, %90 : vector<2x64xi1>, vector<2x64xf32>
    %c4 = arith.constant 4 : index
    %c0_28 = arith.constant 0 : index
    %92 = vector.load %arg9[%c4, %c0_28] : memref<16x192xf32, #tpu.memory_space<vmem>>, vector<2x192xf32>
    %cst_29 = arith.constant dense<0.000000e+00> : vector<2x192xf32>
    %93 = tpu.matmul %89, %15, %cst_29 {dimension_numbers = #tpu.dot_dimension_numbers<[1], [0], [0], [1], [0, 0, 1, 1], [], []>} : vector<2x64xf32>, vector<64x192xf32>, vector<2x192xf32> -> vector<2x192xf32>
    %94 = vector.broadcast %16 : vector<1x192xf32> to vector<2x192xf32>
    %95 = arith.addf %93, %94 : vector<2x192xf32>
    %96 = vector.extract_strided_slice %92 {offsets = [0, 0], sizes = [2, 128], strides = [1, 1]} : vector<2x192xf32> to vector<2x128xf32>
    %97 = vector.extract_strided_slice %95 {offsets = [0, 0], sizes = [2, 128], strides = [1, 1]} : vector<2x192xf32> to vector<2x128xf32>
    %98 = arith.addf %96, %97 : vector<2x128xf32>
    %99 = arith.negf %98 : vector<2x128xf32>
    %100 = math.exp %99 : vector<2x128xf32>
    %cst_30 = arith.constant 1.000000e+00 : f32
    %101 = vector.broadcast %cst_30 : f32 to vector<2x128xf32>
    %102 = arith.addf %101, %100 : vector<2x128xf32>
    %103 = arith.divf %101, %102 : vector<2x128xf32>
    %104 = vector.extract_strided_slice %92 {offsets = [0, 128], sizes = [2, 64], strides = [1, 1]} : vector<2x192xf32> to vector<2x64xf32>
    %105 = vector.extract_strided_slice %103 {offsets = [0, 0], sizes = [2, 64], strides = [1, 1]} : vector<2x128xf32> to vector<2x64xf32>
    %106 = vector.extract_strided_slice %95 {offsets = [0, 128], sizes = [2, 64], strides = [1, 1]} : vector<2x192xf32> to vector<2x64xf32>
    %107 = arith.mulf %105, %106 : vector<2x64xf32>
    %108 = arith.addf %104, %107 : vector<2x64xf32>
    %109 = math.tanh %108 : vector<2x64xf32>
    %110 = vector.extract_strided_slice %103 {offsets = [0, 64], sizes = [2, 64], strides = [1, 1]} : vector<2x128xf32> to vector<2x64xf32>
    %cst_31 = arith.constant 1.000000e+00 : f32
    %111 = vector.broadcast %cst_31 : f32 to vector<2x64xf32>
    %112 = arith.subf %111, %110 : vector<2x64xf32>
    %113 = arith.subf %109, %89 : vector<2x64xf32>
    %114 = arith.mulf %112, %113 : vector<2x64xf32>
    %115 = arith.addf %89, %114 : vector<2x64xf32>
    %cst_32 = arith.constant 3.000000e+00 : f32
    %116 = vector.broadcast %cst_32 : f32 to vector<1x64xf32>
    %117 = arith.mulf %116, %24 : vector<1x64xf32>
    %cst_33 = arith.constant 2.000000e+00 : f32
    %118 = vector.broadcast %cst_33 : f32 to vector<1x64xf32>
    %119 = arith.addf %118, %117 : vector<1x64xf32>
    %120 = vector.broadcast %119 : vector<1x64xf32> to vector<2x64xf32>
    %121 = arith.cmpf olt, %120, %19 : vector<2x64xf32>
    %122 = arith.select %121, %115, %89 : vector<2x64xi1>, vector<2x64xf32>
    %cst_34 = arith.constant 0.000000e+00 : f32
    %123 = vector.broadcast %cst_34 : f32 to vector<2x64xf32>
    %124 = arith.select %121, %115, %123 : vector<2x64xi1>, vector<2x64xf32>
    %c6 = arith.constant 6 : index
    %c0_35 = arith.constant 0 : index
    %125 = vector.load %arg9[%c6, %c0_35] : memref<16x192xf32, #tpu.memory_space<vmem>>, vector<2x192xf32>
    %cst_36 = arith.constant dense<0.000000e+00> : vector<2x192xf32>
    %126 = tpu.matmul %122, %15, %cst_36 {dimension_numbers = #tpu.dot_dimension_numbers<[1], [0], [0], [1], [0, 0, 1, 1], [], []>} : vector<2x64xf32>, vector<64x192xf32>, vector<2x192xf32> -> vector<2x192xf32>
    %127 = vector.broadcast %16 : vector<1x192xf32> to vector<2x192xf32>
    %128 = arith.addf %126, %127 : vector<2x192xf32>
    %129 = vector.extract_strided_slice %125 {offsets = [0, 0], sizes = [2, 128], strides = [1, 1]} : vector<2x192xf32> to vector<2x128xf32>
    %130 = vector.extract_strided_slice %128 {offsets = [0, 0], sizes = [2, 128], strides = [1, 1]} : vector<2x192xf32> to vector<2x128xf32>
    %131 = arith.addf %129, %130 : vector<2x128xf32>
    %132 = arith.negf %131 : vector<2x128xf32>
    %133 = math.exp %132 : vector<2x128xf32>
    %cst_37 = arith.constant 1.000000e+00 : f32
    %134 = vector.broadcast %cst_37 : f32 to vector<2x128xf32>
    %135 = arith.addf %134, %133 : vector<2x128xf32>
    %136 = arith.divf %134, %135 : vector<2x128xf32>
    %137 = vector.extract_strided_slice %125 {offsets = [0, 128], sizes = [2, 64], strides = [1, 1]} : vector<2x192xf32> to vector<2x64xf32>
    %138 = vector.extract_strided_slice %136 {offsets = [0, 0], sizes = [2, 64], strides = [1, 1]} : vector<2x128xf32> to vector<2x64xf32>
    %139 = vector.extract_strided_slice %128 {offsets = [0, 128], sizes = [2, 64], strides = [1, 1]} : vector<2x192xf32> to vector<2x64xf32>
    %140 = arith.mulf %138, %139 : vector<2x64xf32>
    %141 = arith.addf %137, %140 : vector<2x64xf32>
    %142 = math.tanh %141 : vector<2x64xf32>
    %143 = vector.extract_strided_slice %136 {offsets = [0, 64], sizes = [2, 64], strides = [1, 1]} : vector<2x128xf32> to vector<2x64xf32>
    %cst_38 = arith.constant 1.000000e+00 : f32
    %144 = vector.broadcast %cst_38 : f32 to vector<2x64xf32>
    %145 = arith.subf %144, %143 : vector<2x64xf32>
    %146 = arith.subf %142, %122 : vector<2x64xf32>
    %147 = arith.mulf %145, %146 : vector<2x64xf32>
    %148 = arith.addf %122, %147 : vector<2x64xf32>
    %cst_39 = arith.constant 1.000000e+00 : f32
    %149 = vector.broadcast %cst_39 : f32 to vector<1x64xf32>
    %150 = arith.mulf %149, %24 : vector<1x64xf32>
    %cst_40 = arith.constant 3.000000e+00 : f32
    %151 = vector.broadcast %cst_40 : f32 to vector<1x64xf32>
    %152 = arith.addf %151, %150 : vector<1x64xf32>
    %153 = vector.broadcast %152 : vector<1x64xf32> to vector<2x64xf32>
    %154 = arith.cmpf olt, %153, %19 : vector<2x64xf32>
    %155 = arith.select %154, %148, %122 : vector<2x64xi1>, vector<2x64xf32>
    %cst_41 = arith.constant 0.000000e+00 : f32
    %156 = vector.broadcast %cst_41 : f32 to vector<2x64xf32>
    %157 = arith.select %154, %148, %156 : vector<2x64xi1>, vector<2x64xf32>
    %c8 = arith.constant 8 : index
    %c0_42 = arith.constant 0 : index
    %158 = vector.load %arg9[%c8, %c0_42] : memref<16x192xf32, #tpu.memory_space<vmem>>, vector<2x192xf32>
    %cst_43 = arith.constant dense<0.000000e+00> : vector<2x192xf32>
    %159 = tpu.matmul %155, %15, %cst_43 {dimension_numbers = #tpu.dot_dimension_numbers<[1], [0], [0], [1], [0, 0, 1, 1], [], []>} : vector<2x64xf32>, vector<64x192xf32>, vector<2x192xf32> -> vector<2x192xf32>
    %160 = vector.broadcast %16 : vector<1x192xf32> to vector<2x192xf32>
    %161 = arith.addf %159, %160 : vector<2x192xf32>
    %162 = vector.extract_strided_slice %158 {offsets = [0, 0], sizes = [2, 128], strides = [1, 1]} : vector<2x192xf32> to vector<2x128xf32>
    %163 = vector.extract_strided_slice %161 {offsets = [0, 0], sizes = [2, 128], strides = [1, 1]} : vector<2x192xf32> to vector<2x128xf32>
    %164 = arith.addf %162, %163 : vector<2x128xf32>
    %165 = arith.negf %164 : vector<2x128xf32>
    %166 = math.exp %165 : vector<2x128xf32>
    %cst_44 = arith.constant 1.000000e+00 : f32
    %167 = vector.broadcast %cst_44 : f32 to vector<2x128xf32>
    %168 = arith.addf %167, %166 : vector<2x128xf32>
    %169 = arith.divf %167, %168 : vector<2x128xf32>
    %170 = vector.extract_strided_slice %158 {offsets = [0, 128], sizes = [2, 64], strides = [1, 1]} : vector<2x192xf32> to vector<2x64xf32>
    %171 = vector.extract_strided_slice %169 {offsets = [0, 0], sizes = [2, 64], strides = [1, 1]} : vector<2x128xf32> to vector<2x64xf32>
    %172 = vector.extract_strided_slice %161 {offsets = [0, 128], sizes = [2, 64], strides = [1, 1]} : vector<2x192xf32> to vector<2x64xf32>
    %173 = arith.mulf %171, %172 : vector<2x64xf32>
    %174 = arith.addf %170, %173 : vector<2x64xf32>
    %175 = math.tanh %174 : vector<2x64xf32>
    %176 = vector.extract_strided_slice %169 {offsets = [0, 64], sizes = [2, 64], strides = [1, 1]} : vector<2x128xf32> to vector<2x64xf32>
    %cst_45 = arith.constant 1.000000e+00 : f32
    %177 = vector.broadcast %cst_45 : f32 to vector<2x64xf32>
    %178 = arith.subf %177, %176 : vector<2x64xf32>
    %179 = arith.subf %175, %155 : vector<2x64xf32>
    %180 = arith.mulf %178, %179 : vector<2x64xf32>
    %181 = arith.addf %155, %180 : vector<2x64xf32>
    %cst_46 = arith.constant -1.000000e+00 : f32
    %182 = vector.broadcast %cst_46 : f32 to vector<1x64xf32>
    %183 = arith.mulf %182, %24 : vector<1x64xf32>
    %cst_47 = arith.constant 4.000000e+00 : f32
    %184 = vector.broadcast %cst_47 : f32 to vector<1x64xf32>
    %185 = arith.addf %184, %183 : vector<1x64xf32>
    %186 = vector.broadcast %185 : vector<1x64xf32> to vector<2x64xf32>
    %187 = arith.cmpf olt, %186, %19 : vector<2x64xf32>
    %188 = arith.select %187, %181, %155 : vector<2x64xi1>, vector<2x64xf32>
    %cst_48 = arith.constant 0.000000e+00 : f32
    %189 = vector.broadcast %cst_48 : f32 to vector<2x64xf32>
    %190 = arith.select %187, %181, %189 : vector<2x64xi1>, vector<2x64xf32>
    %c10 = arith.constant 10 : index
    %c0_49 = arith.constant 0 : index
    %191 = vector.load %arg9[%c10, %c0_49] : memref<16x192xf32, #tpu.memory_space<vmem>>, vector<2x192xf32>
    %cst_50 = arith.constant dense<0.000000e+00> : vector<2x192xf32>
    %192 = tpu.matmul %188, %15, %cst_50 {dimension_numbers = #tpu.dot_dimension_numbers<[1], [0], [0], [1], [0, 0, 1, 1], [], []>} : vector<2x64xf32>, vector<64x192xf32>, vector<2x192xf32> -> vector<2x192xf32>
    %193 = vector.broadcast %16 : vector<1x192xf32> to vector<2x192xf32>
    %194 = arith.addf %192, %193 : vector<2x192xf32>
    %195 = vector.extract_strided_slice %191 {offsets = [0, 0], sizes = [2, 128], strides = [1, 1]} : vector<2x192xf32> to vector<2x128xf32>
    %196 = vector.extract_strided_slice %194 {offsets = [0, 0], sizes = [2, 128], strides = [1, 1]} : vector<2x192xf32> to vector<2x128xf32>
    %197 = arith.addf %195, %196 : vector<2x128xf32>
    %198 = arith.negf %197 : vector<2x128xf32>
    %199 = math.exp %198 : vector<2x128xf32>
    %cst_51 = arith.constant 1.000000e+00 : f32
    %200 = vector.broadcast %cst_51 : f32 to vector<2x128xf32>
    %201 = arith.addf %200, %199 : vector<2x128xf32>
    %202 = arith.divf %200, %201 : vector<2x128xf32>
    %203 = vector.extract_strided_slice %191 {offsets = [0, 128], sizes = [2, 64], strides = [1, 1]} : vector<2x192xf32> to vector<2x64xf32>
    %204 = vector.extract_strided_slice %202 {offsets = [0, 0], sizes = [2, 64], strides = [1, 1]} : vector<2x128xf32> to vector<2x64xf32>
    %205 = vector.extract_strided_slice %194 {offsets = [0, 128], sizes = [2, 64], strides = [1, 1]} : vector<2x192xf32> to vector<2x64xf32>
    %206 = arith.mulf %204, %205 : vector<2x64xf32>
    %207 = arith.addf %203, %206 : vector<2x64xf32>
    %208 = math.tanh %207 : vector<2x64xf32>
    %209 = vector.extract_strided_slice %202 {offsets = [0, 64], sizes = [2, 64], strides = [1, 1]} : vector<2x128xf32> to vector<2x64xf32>
    %cst_52 = arith.constant 1.000000e+00 : f32
    %210 = vector.broadcast %cst_52 : f32 to vector<2x64xf32>
    %211 = arith.subf %210, %209 : vector<2x64xf32>
    %212 = arith.subf %208, %188 : vector<2x64xf32>
    %213 = arith.mulf %211, %212 : vector<2x64xf32>
    %214 = arith.addf %188, %213 : vector<2x64xf32>
    %cst_53 = arith.constant -3.000000e+00 : f32
    %215 = vector.broadcast %cst_53 : f32 to vector<1x64xf32>
    %216 = arith.mulf %215, %24 : vector<1x64xf32>
    %cst_54 = arith.constant 5.000000e+00 : f32
    %217 = vector.broadcast %cst_54 : f32 to vector<1x64xf32>
    %218 = arith.addf %217, %216 : vector<1x64xf32>
    %219 = vector.broadcast %218 : vector<1x64xf32> to vector<2x64xf32>
    %220 = arith.cmpf olt, %219, %19 : vector<2x64xf32>
    %221 = arith.select %220, %214, %188 : vector<2x64xi1>, vector<2x64xf32>
    %cst_55 = arith.constant 0.000000e+00 : f32
    %222 = vector.broadcast %cst_55 : f32 to vector<2x64xf32>
    %223 = arith.select %220, %214, %222 : vector<2x64xi1>, vector<2x64xf32>
    %c12 = arith.constant 12 : index
    %c0_56 = arith.constant 0 : index
    %224 = vector.load %arg9[%c12, %c0_56] : memref<16x192xf32, #tpu.memory_space<vmem>>, vector<2x192xf32>
    %cst_57 = arith.constant dense<0.000000e+00> : vector<2x192xf32>
    %225 = tpu.matmul %221, %15, %cst_57 {dimension_numbers = #tpu.dot_dimension_numbers<[1], [0], [0], [1], [0, 0, 1, 1], [], []>} : vector<2x64xf32>, vector<64x192xf32>, vector<2x192xf32> -> vector<2x192xf32>
    %226 = vector.broadcast %16 : vector<1x192xf32> to vector<2x192xf32>
    %227 = arith.addf %225, %226 : vector<2x192xf32>
    %228 = vector.extract_strided_slice %224 {offsets = [0, 0], sizes = [2, 128], strides = [1, 1]} : vector<2x192xf32> to vector<2x128xf32>
    %229 = vector.extract_strided_slice %227 {offsets = [0, 0], sizes = [2, 128], strides = [1, 1]} : vector<2x192xf32> to vector<2x128xf32>
    %230 = arith.addf %228, %229 : vector<2x128xf32>
    %231 = arith.negf %230 : vector<2x128xf32>
    %232 = math.exp %231 : vector<2x128xf32>
    %cst_58 = arith.constant 1.000000e+00 : f32
    %233 = vector.broadcast %cst_58 : f32 to vector<2x128xf32>
    %234 = arith.addf %233, %232 : vector<2x128xf32>
    %235 = arith.divf %233, %234 : vector<2x128xf32>
    %236 = vector.extract_strided_slice %224 {offsets = [0, 128], sizes = [2, 64], strides = [1, 1]} : vector<2x192xf32> to vector<2x64xf32>
    %237 = vector.extract_strided_slice %235 {offsets = [0, 0], sizes = [2, 64], strides = [1, 1]} : vector<2x128xf32> to vector<2x64xf32>
    %238 = vector.extract_strided_slice %227 {offsets = [0, 128], sizes = [2, 64], strides = [1, 1]} : vector<2x192xf32> to vector<2x64xf32>
    %239 = arith.mulf %237, %238 : vector<2x64xf32>
    %240 = arith.addf %236, %239 : vector<2x64xf32>
    %241 = math.tanh %240 : vector<2x64xf32>
    %242 = vector.extract_strided_slice %235 {offsets = [0, 64], sizes = [2, 64], strides = [1, 1]} : vector<2x128xf32> to vector<2x64xf32>
    %cst_59 = arith.constant 1.000000e+00 : f32
    %243 = vector.broadcast %cst_59 : f32 to vector<2x64xf32>
    %244 = arith.subf %243, %242 : vector<2x64xf32>
    %245 = arith.subf %241, %221 : vector<2x64xf32>
    %246 = arith.mulf %244, %245 : vector<2x64xf32>
    %247 = arith.addf %221, %246 : vector<2x64xf32>
    %cst_60 = arith.constant -5.000000e+00 : f32
    %248 = vector.broadcast %cst_60 : f32 to vector<1x64xf32>
    %249 = arith.mulf %248, %24 : vector<1x64xf32>
    %cst_61 = arith.constant 6.000000e+00 : f32
    %250 = vector.broadcast %cst_61 : f32 to vector<1x64xf32>
    %251 = arith.addf %250, %249 : vector<1x64xf32>
    %252 = vector.broadcast %251 : vector<1x64xf32> to vector<2x64xf32>
    %253 = arith.cmpf olt, %252, %19 : vector<2x64xf32>
    %254 = arith.select %253, %247, %221 : vector<2x64xi1>, vector<2x64xf32>
    %cst_62 = arith.constant 0.000000e+00 : f32
    %255 = vector.broadcast %cst_62 : f32 to vector<2x64xf32>
    %256 = arith.select %253, %247, %255 : vector<2x64xi1>, vector<2x64xf32>
    %c14 = arith.constant 14 : index
    %c0_63 = arith.constant 0 : index
    %257 = vector.load %arg9[%c14, %c0_63] : memref<16x192xf32, #tpu.memory_space<vmem>>, vector<2x192xf32>
    %cst_64 = arith.constant dense<0.000000e+00> : vector<2x192xf32>
    %258 = tpu.matmul %254, %15, %cst_64 {dimension_numbers = #tpu.dot_dimension_numbers<[1], [0], [0], [1], [0, 0, 1, 1], [], []>} : vector<2x64xf32>, vector<64x192xf32>, vector<2x192xf32> -> vector<2x192xf32>
    %259 = vector.broadcast %16 : vector<1x192xf32> to vector<2x192xf32>
    %260 = arith.addf %258, %259 : vector<2x192xf32>
    %261 = vector.extract_strided_slice %257 {offsets = [0, 0], sizes = [2, 128], strides = [1, 1]} : vector<2x192xf32> to vector<2x128xf32>
    %262 = vector.extract_strided_slice %260 {offsets = [0, 0], sizes = [2, 128], strides = [1, 1]} : vector<2x192xf32> to vector<2x128xf32>
    %263 = arith.addf %261, %262 : vector<2x128xf32>
    %264 = arith.negf %263 : vector<2x128xf32>
    %265 = math.exp %264 : vector<2x128xf32>
    %cst_65 = arith.constant 1.000000e+00 : f32
    %266 = vector.broadcast %cst_65 : f32 to vector<2x128xf32>
    %267 = arith.addf %266, %265 : vector<2x128xf32>
    %268 = arith.divf %266, %267 : vector<2x128xf32>
    %269 = vector.extract_strided_slice %257 {offsets = [0, 128], sizes = [2, 64], strides = [1, 1]} : vector<2x192xf32> to vector<2x64xf32>
    %270 = vector.extract_strided_slice %268 {offsets = [0, 0], sizes = [2, 64], strides = [1, 1]} : vector<2x128xf32> to vector<2x64xf32>
    %271 = vector.extract_strided_slice %260 {offsets = [0, 128], sizes = [2, 64], strides = [1, 1]} : vector<2x192xf32> to vector<2x64xf32>
    %272 = arith.mulf %270, %271 : vector<2x64xf32>
    %273 = arith.addf %269, %272 : vector<2x64xf32>
    %274 = math.tanh %273 : vector<2x64xf32>
    %275 = vector.extract_strided_slice %268 {offsets = [0, 64], sizes = [2, 64], strides = [1, 1]} : vector<2x128xf32> to vector<2x64xf32>
    %cst_66 = arith.constant 1.000000e+00 : f32
    %276 = vector.broadcast %cst_66 : f32 to vector<2x64xf32>
    %277 = arith.subf %276, %275 : vector<2x64xf32>
    %278 = arith.subf %274, %254 : vector<2x64xf32>
    %279 = arith.mulf %277, %278 : vector<2x64xf32>
    %280 = arith.addf %254, %279 : vector<2x64xf32>
    %cst_67 = arith.constant -7.000000e+00 : f32
    %281 = vector.broadcast %cst_67 : f32 to vector<1x64xf32>
    %282 = arith.mulf %281, %24 : vector<1x64xf32>
    %cst_68 = arith.constant 7.000000e+00 : f32
    %283 = vector.broadcast %cst_68 : f32 to vector<1x64xf32>
    %284 = arith.addf %283, %282 : vector<1x64xf32>
    %285 = vector.broadcast %284 : vector<1x64xf32> to vector<2x64xf32>
    %286 = arith.cmpf olt, %285, %19 : vector<2x64xf32>
    %287 = arith.select %286, %280, %254 : vector<2x64xi1>, vector<2x64xf32>
    %cst_69 = arith.constant 0.000000e+00 : f32
    %288 = vector.broadcast %cst_69 : f32 to vector<2x64xf32>
    %289 = arith.select %286, %280, %288 : vector<2x64xi1>, vector<2x64xf32>
    %290 = vector.extract_strided_slice %58 {offsets = [0, 0], sizes = [1, 32], strides = [1, 1]} : vector<2x64xf32> to vector<1x32xf32>
    %291 = vector.extract_strided_slice %91 {offsets = [0, 0], sizes = [1, 32], strides = [1, 1]} : vector<2x64xf32> to vector<1x32xf32>
    %292 = vector.extract_strided_slice %124 {offsets = [0, 0], sizes = [1, 32], strides = [1, 1]} : vector<2x64xf32> to vector<1x32xf32>
    %293 = vector.extract_strided_slice %157 {offsets = [0, 0], sizes = [1, 32], strides = [1, 1]} : vector<2x64xf32> to vector<1x32xf32>
    %294 = vector.extract_strided_slice %190 {offsets = [0, 0], sizes = [1, 32], strides = [1, 1]} : vector<2x64xf32> to vector<1x32xf32>
    %295 = vector.extract_strided_slice %223 {offsets = [0, 0], sizes = [1, 32], strides = [1, 1]} : vector<2x64xf32> to vector<1x32xf32>
    %296 = vector.extract_strided_slice %256 {offsets = [0, 0], sizes = [1, 32], strides = [1, 1]} : vector<2x64xf32> to vector<1x32xf32>
    %297 = vector.extract_strided_slice %289 {offsets = [0, 0], sizes = [1, 32], strides = [1, 1]} : vector<2x64xf32> to vector<1x32xf32>
    %298 = tpu.concatenate %290, %291, %292, %293, %294, %295, %296, %297 in 0 : vector<1x32xf32>, vector<1x32xf32>, vector<1x32xf32>, vector<1x32xf32>, vector<1x32xf32>, vector<1x32xf32>, vector<1x32xf32>, vector<1x32xf32> -> vector<8x32xf32>
    %299 = vector.extract_strided_slice %289 {offsets = [0, 32], sizes = [1, 32], strides = [1, 1]} : vector<2x64xf32> to vector<1x32xf32>
    %300 = vector.extract_strided_slice %256 {offsets = [0, 32], sizes = [1, 32], strides = [1, 1]} : vector<2x64xf32> to vector<1x32xf32>
    %301 = vector.extract_strided_slice %223 {offsets = [0, 32], sizes = [1, 32], strides = [1, 1]} : vector<2x64xf32> to vector<1x32xf32>
    %302 = vector.extract_strided_slice %190 {offsets = [0, 32], sizes = [1, 32], strides = [1, 1]} : vector<2x64xf32> to vector<1x32xf32>
    %303 = vector.extract_strided_slice %157 {offsets = [0, 32], sizes = [1, 32], strides = [1, 1]} : vector<2x64xf32> to vector<1x32xf32>
    %304 = vector.extract_strided_slice %124 {offsets = [0, 32], sizes = [1, 32], strides = [1, 1]} : vector<2x64xf32> to vector<1x32xf32>
    %305 = vector.extract_strided_slice %91 {offsets = [0, 32], sizes = [1, 32], strides = [1, 1]} : vector<2x64xf32> to vector<1x32xf32>
    %306 = vector.extract_strided_slice %58 {offsets = [0, 32], sizes = [1, 32], strides = [1, 1]} : vector<2x64xf32> to vector<1x32xf32>
    %307 = tpu.concatenate %299, %300, %301, %302, %303, %304, %305, %306 in 0 : vector<1x32xf32>, vector<1x32xf32>, vector<1x32xf32>, vector<1x32xf32>, vector<1x32xf32>, vector<1x32xf32>, vector<1x32xf32>, vector<1x32xf32> -> vector<8x32xf32>
    %308 = vector.extract_strided_slice %58 {offsets = [1, 0], sizes = [1, 32], strides = [1, 1]} : vector<2x64xf32> to vector<1x32xf32>
    %309 = vector.extract_strided_slice %91 {offsets = [1, 0], sizes = [1, 32], strides = [1, 1]} : vector<2x64xf32> to vector<1x32xf32>
    %310 = vector.extract_strided_slice %124 {offsets = [1, 0], sizes = [1, 32], strides = [1, 1]} : vector<2x64xf32> to vector<1x32xf32>
    %311 = vector.extract_strided_slice %157 {offsets = [1, 0], sizes = [1, 32], strides = [1, 1]} : vector<2x64xf32> to vector<1x32xf32>
    %312 = vector.extract_strided_slice %190 {offsets = [1, 0], sizes = [1, 32], strides = [1, 1]} : vector<2x64xf32> to vector<1x32xf32>
    %313 = vector.extract_strided_slice %223 {offsets = [1, 0], sizes = [1, 32], strides = [1, 1]} : vector<2x64xf32> to vector<1x32xf32>
    %314 = vector.extract_strided_slice %256 {offsets = [1, 0], sizes = [1, 32], strides = [1, 1]} : vector<2x64xf32> to vector<1x32xf32>
    %315 = vector.extract_strided_slice %289 {offsets = [1, 0], sizes = [1, 32], strides = [1, 1]} : vector<2x64xf32> to vector<1x32xf32>
    %316 = tpu.concatenate %308, %309, %310, %311, %312, %313, %314, %315 in 0 : vector<1x32xf32>, vector<1x32xf32>, vector<1x32xf32>, vector<1x32xf32>, vector<1x32xf32>, vector<1x32xf32>, vector<1x32xf32>, vector<1x32xf32> -> vector<8x32xf32>
    %317 = vector.extract_strided_slice %289 {offsets = [1, 32], sizes = [1, 32], strides = [1, 1]} : vector<2x64xf32> to vector<1x32xf32>
    %318 = vector.extract_strided_slice %256 {offsets = [1, 32], sizes = [1, 32], strides = [1, 1]} : vector<2x64xf32> to vector<1x32xf32>
    %319 = vector.extract_strided_slice %223 {offsets = [1, 32], sizes = [1, 32], strides = [1, 1]} : vector<2x64xf32> to vector<1x32xf32>
    %320 = vector.extract_strided_slice %190 {offsets = [1, 32], sizes = [1, 32], strides = [1, 1]} : vector<2x64xf32> to vector<1x32xf32>
    %321 = vector.extract_strided_slice %157 {offsets = [1, 32], sizes = [1, 32], strides = [1, 1]} : vector<2x64xf32> to vector<1x32xf32>
    %322 = vector.extract_strided_slice %124 {offsets = [1, 32], sizes = [1, 32], strides = [1, 1]} : vector<2x64xf32> to vector<1x32xf32>
    %323 = vector.extract_strided_slice %91 {offsets = [1, 32], sizes = [1, 32], strides = [1, 1]} : vector<2x64xf32> to vector<1x32xf32>
    %324 = vector.extract_strided_slice %58 {offsets = [1, 32], sizes = [1, 32], strides = [1, 1]} : vector<2x64xf32> to vector<1x32xf32>
    %325 = tpu.concatenate %317, %318, %319, %320, %321, %322, %323, %324 in 0 : vector<1x32xf32>, vector<1x32xf32>, vector<1x32xf32>, vector<1x32xf32>, vector<1x32xf32>, vector<1x32xf32>, vector<1x32xf32>, vector<1x32xf32> -> vector<8x32xf32>
    %326 = tpu.concatenate %298, %307, %316, %325 in 1 : vector<8x32xf32>, vector<8x32xf32>, vector<8x32xf32>, vector<8x32xf32> -> vector<8x128xf32>
    %c0_70 = arith.constant 0 : index
    %c0_71 = arith.constant 0 : index
    %327 = vector.load %arg7[%c0_70, %c0_71] : memref<8x128xf32, #tpu.memory_space<vmem>>, vector<8x128xf32>
    tpu.vector_store %arg7[%c0_70, %c0_71], %326 {strides = array<i32>} : memref<8x128xf32, #tpu.memory_space<vmem>>, vector<8x128xf32>,
    %c0_72 = arith.constant 0 : index
    %c0_73 = arith.constant 0 : index
    %328 = vector.load %arg5[%c0_72, %c0_73] : memref<64x32xf32, #tpu.memory_space<vmem>>, vector<64x32xf32>
    %cst_74 = arith.constant dense<0.000000e+00> : vector<2x32xf32>
    %329 = tpu.matmul %287, %328, %cst_74 {dimension_numbers = #tpu.dot_dimension_numbers<[1], [0], [0], [1], [0, 0, 1, 1], [], []>} : vector<2x64xf32>, vector<64x32xf32>, vector<2x32xf32> -> vector<2x32xf32>
    %c0_75 = arith.constant 0 : index
    %c0_76 = arith.constant 0 : index
    %330 = vector.load %arg6[%c0_75, %c0_76] : memref<1x32xf32, #tpu.memory_space<vmem>>, vector<1x32xf32>
    %331 = vector.broadcast %330 : vector<1x32xf32> to vector<2x32xf32>
    %332 = arith.addf %329, %331 : vector<2x32xf32>
    %333 = math.tanh %332 : vector<2x32xf32>
    %c0_77 = arith.constant 0 : index
    %c0_78 = arith.constant 0 : index
    %334 = vector.load %arg8[%c0_77, %c0_78] : memref<2x32xf32, #tpu.memory_space<vmem>>, vector<2x32xf32>
    tpu.vector_store %arg8[%c0_77, %c0_78], %333 {strides = array<i32>} : memref<2x32xf32, #tpu.memory_space<vmem>>, vector<2x32xf32>,
    return
  }
}

</mosaic_0001>

<llo_original>
// kernel: encoder_forward.1
$region0: #{encoder_forward.1}
  #allocation0 [shape = 'u32[]', space=smem, size = 0x4, offset = 0x4, fixed_abs, tag = 'smem constant byte address 0x4 - core index']
  #allocation1 [shape = 'u32[72,128]{1,0:T(1,128)}', space=vmem, size = 0x9000, scoped, tag = 'internal scratch']
  #allocation2 [shape = 'f32[16,192]{1,0:T(8,128)}', space=vmem, size = 0x4000, scoped, tag = 'scratch operand']
  %s0 = inlined_call_operand.vmem [shape: s32[16,2], index: 0, kind: input, shape index: {}]
  %s1 = inlined_call_operand.vmem [shape: f32[2,1], index: 1, kind: input, shape index: {}]
  %s2 = inlined_call_operand.vmem [shape: f32[128,192], index: 2, kind: input, shape index: {}]
  %s3 = inlined_call_operand.vmem [shape: f32[64,192], index: 3, kind: input, shape index: {}]
  %s4 = inlined_call_operand.vmem [shape: f32[1,192], index: 4, kind: input, shape index: {}]
  %s5 = inlined_call_operand.vmem [shape: f32[64,32], index: 5, kind: input, shape index: {}]
  %s6 = inlined_call_operand.vmem [shape: f32[1,32], index: 6, kind: input, shape index: {}]
  %s7 = inlined_call_operand.vmem [shape: f32[8,128], index: 7, kind: output, shape index: {0}]
  %s8 = inlined_call_operand.hbm [shape: f32[2,32], index: 8, kind: output, shape index: {1}]
  %9 = xla_tuple %s7, %s8
  %s10 = sld [smem:[#allocation0]]
  $region46: #{encoder_forward.1} parent=0
    _
  %s12 = ssub.s32 1, %s10
  %s13 = scalar_select 0, %s12, %s10
  $region1: #{encoder_forward.1} parent=0
    #allocation3 [shape = 'u8[1024]{0}', space=vmem, size = 0x400, scoped, tag = 'output window, operand 1, single buffered']
    #allocation4 [shape = 's32[1]{0}', space=sflag, size = 0x4, scoped, tag = 'scoped memory for encoder_forward.1']
    %14 = vsyncpa [#allocation4], 0
    // Predicated region
    $region2: #{encoder_forward.1} parent=1 // pred_check
      _
    $region3: #{encoder_forward.1} parent=1 // pred_check_branch
      %16 = sbr.rel (0) target = $region5
    $region4: #{encoder_forward.1} parent=1 // pred_region
      _
    $region5: #{encoder_forward.1} parent=1 // pred_fallthru
      _
    // Predicated region
    $region6: #{encoder_forward.1} parent=1 // pred_check
      _
    $region7: #{encoder_forward.1} parent=1 // pred_check_branch
      %18 = sbr.rel (0) target = $region9
    $region8: #{encoder_forward.1} parent=1 // pred_region
      _
    $region9: #{encoder_forward.1} parent=1 // pred_fallthru
      _
    // Predicated region
    $region10: #{encoder_forward.1} parent=1 // pred_check
      _
    $region11: #{encoder_forward.1} parent=1 // pred_check_branch
      %20 = sbr.rel (0) target = $region13
    $region12: #{encoder_forward.1} parent=1 // pred_region
      _
    $region13: #{encoder_forward.1} parent=1 // pred_fallthru
      _
    // Predicated region
    $region14: #{encoder_forward.1} parent=1 // pred_check
      _
    $region15: #{encoder_forward.1} parent=1 // pred_check_branch
      %22 = sbr.rel (0) target = $region17
    $region16: #{encoder_forward.1} parent=1 // pred_region
      _
    $region17: #{encoder_forward.1} parent=1 // pred_fallthru
      _
    // Predicated region
    $region18: #{encoder_forward.1} parent=1 // pred_check
      _
    $region19: #{encoder_forward.1} parent=1 // pred_check_branch
      %24 = sbr.rel (0) target = $region21
    $region20: #{encoder_forward.1} parent=1 // pred_region
      _
    $region21: #{encoder_forward.1} parent=1 // pred_fallthru
      _
    // Predicated region
    $region22: #{encoder_forward.1} parent=1 // pred_check
      _
    $region23: #{encoder_forward.1} parent=1 // pred_check_branch
      %26 = sbr.rel (0) target = $region25
    $region24: #{encoder_forward.1} parent=1 // pred_region
      _
    $region25: #{encoder_forward.1} parent=1 // pred_fallthru
      _
    // Predicated region
    $region26: #{encoder_forward.1} parent=1 // pred_check
      _
    $region27: #{encoder_forward.1} parent=1 // pred_check_branch
      %28 = sbr.rel (0) target = $region29
    $region28: #{encoder_forward.1} parent=1 // pred_region
      _
    $region29: #{encoder_forward.1} parent=1 // pred_fallthru
      _
    %v29 = vlaneseq
    %v30 = vand.u32 %v29, 127
    %v31 = vld [vmem:[%s0] sm:$0xff]
    %v32 = vld [vmem:[%s0 + $0x8] sm:$0xff]
    %33 = vset.pattern.permute.xlu0 0
    %34 = vperm.xlu0 %33, %v31
    %v35 = vpop.permute.xlu0 %34
    %36 = vset.pattern.permute.xlu0 0
    %37 = vperm.xlu0 %36, %v32
    %v38 = vpop.permute.xlu0 %37
    %vm39 = vcmp.eq.s32.totalorder %v30, %v35
    %vm40 = vcmp.eq.s32.totalorder %v30, %v38
    %v41 = vadd.s32 %v31, 50
    %v42 = vadd.s32 %v32, 50
    %43 = vset.pattern.permute.xlu0 1
    %44 = vperm.xlu0 %43, %v41
    %v45 = vpop.permute.xlu0 %44
    %46 = vset.pattern.permute.xlu0 1
    %47 = vperm.xlu0 %46, %v42
    %v48 = vpop.permute.xlu0 %47
    %vm49 = vcmp.eq.s32.totalorder %v30, %v45
    %vm50 = vcmp.eq.s32.totalorder %v30, %v48
    %vm51 = vmor %vm39, %vm49
    %vm52 = vmor %vm40, %vm50
    %v53 = vsel %vm51, 1, 0
    %v54 = vsel %vm52, 1, 0
    %v55 = vcvt.s32.f32 %v53
    %v56 = vcvt.s32.f32 %v54
    %v57 = vld [vmem:[%s2] sm:$0xff]
    %v58 = vld [vmem:[%s2 + $0x8] sm:$0xff]
    %v59 = vld [vmem:[%s2 + $0x10] sm:$0xff]
    %v60 = vld [vmem:[%s2 + $0x18] sm:$0xff]
    %v61 = vld [vmem:[%s2 + $0x20] sm:$0xff]
    %v62 = vld [vmem:[%s2 + $0x28] sm:$0xff]
    %v63 = vld [vmem:[%s2 + $0x30] sm:$0xff]
    %v64 = vld [vmem:[%s2 + $0x38] sm:$0xff]
    %v65 = vld [vmem:[%s2 + $0x40] sm:$0xff]
    %v66 = vld [vmem:[%s2 + $0x48] sm:$0xff]
    %v67 = vld [vmem:[%s2 + $0x50] sm:$0xff]
    %v68 = vld [vmem:[%s2 + $0x58] sm:$0xff]
    %v69 = vld [vmem:[%s2 + $0x60] sm:$0xff]
    %v70 = vld [vmem:[%s2 + $0x68] sm:$0xff]
    %v71 = vld [vmem:[%s2 + $0x70] sm:$0xff]
    %v72 = vld [vmem:[%s2 + $0x78] sm:$0xff]
    %v73 = vld [vmem:[%s2 + $0x80] sm:$0xff]
    %v74 = vld [vmem:[%s2 + $0x88] sm:$0xff]
    %v75 = vld [vmem:[%s2 + $0x90] sm:$0xff]
    %v76 = vld [vmem:[%s2 + $0x98] sm:$0xff]
    %v77 = vld [vmem:[%s2 + $0xa0] sm:$0xff]
    %v78 = vld [vmem:[%s2 + $0xa8] sm:$0xff]
    %v79 = vld [vmem:[%s2 + $0xb0] sm:$0xff]
    %v80 = vld [vmem:[%s2 + $0xb8] sm:$0xff]
    %v81 = vld [vmem:[%s2 + $0xc0] sm:$0xff]
    %v82 = vld [vmem:[%s2 + $0xc8] sm:$0xff]
    %v83 = vld [vmem:[%s2 + $0xd0] sm:$0xff]
    %v84 = vld [vmem:[%s2 + $0xd8] sm:$0xff]
    %v85 = vld [vmem:[%s2 + $0xe0] sm:$0xff]
    %v86 = vld [vmem:[%s2 + $0xe8] sm:$0xff]
    %v87 = vld [vmem:[%s2 + $0xf0] sm:$0xff]
    %v88 = vld [vmem:[%s2 + $0xf8] sm:$0xff]
    %89 = vmatpush.msra.mxu0 %v87
    %90 = vmatpush.msra.mxu0 %v85
    %91 = vmatpush.msra.mxu0 %v83
    %92 = vmatpush.msra.mxu0 %v81
    %93 = vmatpush.msra.mxu0 %v79
    %94 = vmatpush.msra.mxu0 %v77
    %95 = vmatpush.msra.mxu0 %v75
    %96 = vmatpush.msra.mxu0 %v73
    %97 = vmatpush.msra.mxu0 %v71
    %98 = vmatpush.msra.mxu0 %v69
    %99 = vmatpush.msra.mxu0 %v67
    %100 = vmatpush.msra.mxu0 %v65
    %101 = vmatpush.msra.mxu0 %v63
    %102 = vmatpush.msra.mxu0 %v61
    %103 = vmatpush.msra.mxu0 %v59
    %104 = vmatpush.msra.mxu0 %v57
    %105 = vmatmul.f32.gmra.mxu0 %v55
    %v106 = vpop.f32.mrf.mxu0
    %v107 = vadd.f32 0.0, %v106
    %108 = vmatmul.f32.gmra.mxu0 %v56
    %v109 = vpop.f32.mrf.mxu0
    %v110 = vadd.f32 0.0, %v109
    %111 = vdwg.mxu0
    %112 = vmatpush.msra.mxu0 %v88
    %113 = vmatpush.msra.mxu0 %v86
    %114 = vmatpush.msra.mxu0 %v84
    %115 = vmatpush.msra.mxu0 %v82
    %116 = vmatpush.msra.mxu0 %v80
    %117 = vmatpush.msra.mxu0 %v78
    %118 = vmatpush.msra.mxu0 %v76
    %119 = vmatpush.msra.mxu0 %v74
    %120 = vmatpush.msra.mxu0 %v72
    %121 = vmatpush.msra.mxu0 %v70
    %122 = vmatpush.msra.mxu0 %v68
    %123 = vmatpush.msra.mxu0 %v66
    %124 = vmatpush.msra.mxu0 %v64
    %125 = vmatpush.msra.mxu0 %v62
    %126 = vmatpush.msra.mxu0 %v60
    %127 = vmatpush.msra.mxu0 %v58
    %128 = vmatmul.f32.gmra.mxu0 %v55
    %v129 = vpop.f32.mrf.mxu0
    %v130 = vadd.f32 0.0, %v129
    %131 = vmatmul.f32.gmra.mxu0 %v56
    %v132 = vpop.f32.mrf.mxu0
    %v133 = vadd.f32 0.0, %v132
    %134 = vdwg.mxu0
    %135 = vst [vmem:[#allocation2] sm:$0xff] %v107
    %vm136 = vcmask 523264
    %137 = vst.msk [vmem:[#allocation2 + $0x8] sm:$0xff] %vm136, %v130
    %138 = vst [vmem:[#allocation2 + $0x10] sm:$0xff] %v110
    %139 = vst.msk [vmem:[#allocation2 + $0x18] sm:$0xff] %vm136, %v133
    %v140 = vld [vmem:[%s3] sm:$0xff]
    %v141 = vld [vmem:[%s3 + $0x8] sm:$0xff]
    %v142 = vld [vmem:[%s3 + $0x10] sm:$0xff]
    %v143 = vld [vmem:[%s3 + $0x18] sm:$0xff]
    %v144 = vld [vmem:[%s3 + $0x20] sm:$0xff]
    %v145 = vld [vmem:[%s3 + $0x28] sm:$0xff]
    %v146 = vld [vmem:[%s3 + $0x30] sm:$0xff]
    %v147 = vld [vmem:[%s3 + $0x38] sm:$0xff]
    %v148 = vld [vmem:[%s3 + $0x40] sm:$0xff]
    %v149 = vld [vmem:[%s3 + $0x48] sm:$0xff]
    %v150 = vld [vmem:[%s3 + $0x50] sm:$0xff]
    %v151 = vld [vmem:[%s3 + $0x58] sm:$0xff]
    %v152 = vld [vmem:[%s3 + $0x60] sm:$0xff]
    %v153 = vld [vmem:[%s3 + $0x68] sm:$0xff]
    %v154 = vld [vmem:[%s3 + $0x70] sm:$0xff]
    %v155 = vld [vmem:[%s3 + $0x78] sm:$0xff]
    %v156 = vld [vmem:[%s4] sm:$0x3]
    %v157 = vld [vmem:[%s1] sm:$0x3]
    %159 = vset.pattern.permute.xlu0 0
    %160 = vperm.xlu0 %159, %v157
    %v161 = vpop.permute.xlu0 %160
    %vm163 = vcmp.ge.s32.totalorder %v30, 32
    %v164 = vsel %vm163, 1, 0
    %v165 = vcvt.s32.f32 %v164
    %v166 = vld [vmem:[#allocation2] sm:$0x3]
    %v167 = vld [vmem:[#allocation2 + $0x8] sm:$0x3]
    %v169 = vperm.slane %v156, 0
    %v170 = vperm.slane %v156, 1
    %v174 = vsel %vm136, 0.0, 0
    %176 = vmatpush.msra.mxu0 0.0
    %177 = vmatpush.msra.mxu0 0.0
    %178 = vmatpush.msra.mxu0 0.0
    %179 = vmatpush.msra.mxu0 0.0
    %180 = vmatpush.msra.mxu0 0.0
    %181 = vmatpush.msra.mxu0 0.0
    %182 = vmatpush.msra.mxu0 0.0
    %183 = vmatpush.msra.mxu0 0.0
    %184 = vmatpush.msra.mxu0 %v154
    %185 = vmatpush.msra.mxu0 %v152
    %186 = vmatpush.msra.mxu0 %v150
    %187 = vmatpush.msra.mxu0 %v148
    %188 = vmatpush.msra.mxu0 %v146
    %189 = vmatpush.msra.mxu0 %v144
    %190 = vmatpush.msra.mxu0 %v142
    %191 = vmatpush.msra.mxu0 %v140
    %192 = vmatmul.f32.gmra.mxu0 %v174
    %v193 = vpop.f32.mrf.mxu0
    %v194 = vadd.f32 %v169, %v193
    %195 = vdwg.mxu0
    %196 = vmatpush.msra.mxu0 0.0
    %197 = vmatpush.msra.mxu0 0.0
    %198 = vmatpush.msra.mxu0 0.0
    %199 = vmatpush.msra.mxu0 0.0
    %200 = vmatpush.msra.mxu0 0.0
    %201 = vmatpush.msra.mxu0 0.0
    %202 = vmatpush.msra.mxu0 0.0
    %203 = vmatpush.msra.mxu0 0.0
    %204 = vmatpush.msra.mxu0 %v155
    %205 = vmatpush.msra.mxu0 %v153
    %206 = vmatpush.msra.mxu0 %v151
    %207 = vmatpush.msra.mxu0 %v149
    %208 = vmatpush.msra.mxu0 %v147
    %209 = vmatpush.msra.mxu0 %v145
    %210 = vmatpush.msra.mxu0 %v143
    %211 = vmatpush.msra.mxu0 %v141
    %212 = vmatmul.f32.gmra.mxu0 %v174
    %v213 = vpop.f32.mrf.mxu0
    %v214 = vadd.f32 %v170, %v213
    %215 = vdwg.mxu0
    %v216 = vadd.f32 %v166, %v194
    %v217 = vxor.u32 %v216, 2147483648
    %v218 = vmul.f32 %v217, 1.442695
    %v219 = vpow.pop %v218
    %v220 = vadd.f32 %v219, 1.0
    %v221 = vrcp.pop %v220
    %v222 = vmul.f32 %v220, %v221
    %v223 = vsub.f32 1.0, %v222
    %v224 = vmul.f32 %v221, %v223
    %v225 = vadd.f32 %v221, %v224
    %vm226 = vweird.f32 %v220
    %vm227 = vweird.f32 %v221
    %vm228 = vmor %vm226, %vm227
    %v229 = vsel %vm228, %v221, %v225
    %v230 = vand.u32 2147483647, %v220
    %vm231 = vcmp.eq.f32.partialorder %v230, 8.507059e+37
    %v232 = vand.u32 %v220, 2147483648
    %v233 = vor.u32 1.1754944e-38, %v232
    %v234 = vsel %vm231, %v233, %v229
    %v235 = vmul.f32 1.0, %v234
    %v236 = vmul.f32 %v235, %v214
    %v237 = vadd.f32 %v167, %v236
    %v238 = vtanh.pop %v237
    %v239 = vsub.f32 1.0, %v235
    %241 = vrot.lane.b32.xlu0 %v238, 64
    %v242 = vpop.permute.xlu0 %241
    %v244 = vmul.f32 %v239, %v242
    %v245 = vadd.f32 %v244, 0.0
    %v246 = vmul.f32 %v165, 7.0
    %v247 = vadd.f32 %v246, 0.0
    %vm248 = vcmp.lt.f32.partialorder %v247, %v161
    %250 = vrot.lane.b32.xlu0 %v245, 64
    %v251 = vpop.permute.xlu0 %250
    %v253 = vsel %vm248, %v251, 0.0
    %v254 = vld [vmem:[#allocation2] sm:$0xc]
    %v255 = vld [vmem:[#allocation2 + $0x8] sm:$0xc]
    %v257 = vsel %vm136, %v253, 0
    %259 = vmatpush.msra.mxu0 0.0
    %260 = vmatpush.msra.mxu0 0.0
    %261 = vmatpush.msra.mxu0 0.0
    %262 = vmatpush.msra.mxu0 0.0
    %263 = vmatpush.msra.mxu0 0.0
    %264 = vmatpush.msra.mxu0 0.0
    %265 = vmatpush.msra.mxu0 0.0
    %266 = vmatpush.msra.mxu0 0.0
    %267 = vmatpush.msra.mxu0 %v154
    %268 = vmatpush.msra.mxu0 %v152
    %269 = vmatpush.msra.mxu0 %v150
    %270 = vmatpush.msra.mxu0 %v148
    %271 = vmatpush.msra.mxu0 %v146
    %272 = vmatpush.msra.mxu0 %v144
    %273 = vmatpush.msra.mxu0 %v142
    %274 = vmatpush.msra.mxu0 %v140
    %275 = vmatmul.f32.gmra.mxu0 %v257
    %v276 = vpop.f32.mrf.mxu0
    %v277 = vadd.f32 %v169, %v276
    %278 = vdwg.mxu0
    %279 = vmatpush.msra.mxu0 0.0
    %280 = vmatpush.msra.mxu0 0.0
    %281 = vmatpush.msra.mxu0 0.0
    %282 = vmatpush.msra.mxu0 0.0
    %283 = vmatpush.msra.mxu0 0.0
    %284 = vmatpush.msra.mxu0 0.0
    %285 = vmatpush.msra.mxu0 0.0
    %286 = vmatpush.msra.mxu0 0.0
    %287 = vmatpush.msra.mxu0 %v155
    %288 = vmatpush.msra.mxu0 %v153
    %289 = vmatpush.msra.mxu0 %v151
    %290 = vmatpush.msra.mxu0 %v149
    %291 = vmatpush.msra.mxu0 %v147
    %292 = vmatpush.msra.mxu0 %v145
    %293 = vmatpush.msra.mxu0 %v143
    %294 = vmatpush.msra.mxu0 %v141
    %295 = vmatmul.f32.gmra.mxu0 %v257
    %v296 = vpop.f32.mrf.mxu0
    %v297 = vadd.f32 %v170, %v296
    %298 = vdwg.mxu0
    %v300 = vrot.slane %v277, 6
    %v302 = vadd.f32 %v254, %v300
    %v303 = vxor.u32 %v302, 2147483648
    %v304 = vmul.f32 %v303, 1.442695
    %v305 = vpow.pop %v304
    %v306 = vadd.f32 %v305, 1.0
    %v307 = vrcp.pop %v306
    %v308 = vmul.f32 %v306, %v307
    %v309 = vsub.f32 1.0, %v308
    %v310 = vmul.f32 %v307, %v309
    %v311 = vadd.f32 %v307, %v310
    %vm312 = vweird.f32 %v306
    %vm313 = vweird.f32 %v307
    %vm314 = vmor %vm312, %vm313
    %v315 = vsel %vm314, %v307, %v311
    %v316 = vand.u32 2147483647, %v306
    %vm317 = vcmp.eq.f32.partialorder %v316, 8.507059e+37
    %v318 = vand.u32 %v306, 2147483648
    %v319 = vor.u32 1.1754944e-38, %v318
    %v320 = vsel %vm317, %v319, %v315
    %v321 = vmul.f32 1.0, %v320
    %v323 = vrot.slane %v297, 6
    %v325 = vmul.f32 %v321, %v323
    %v326 = vadd.f32 %v255, %v325
    %v327 = vtanh.pop %v326
    %v328 = vsub.f32 1.0, %v321
    %v329 = vrot.slane %v253, 6
    %v331 = vsub.f32 %v327, %v329
    %333 = vrot.lane.b32.xlu0 %v331, 64
    %v334 = vpop.permute.xlu0 %333
    %v336 = vmul.f32 %v328, %v334
    %v338 = vrot.slane %v336, 2
    %339 = vrot.lane.b32.xlu0 %v338, 64
    %v340 = vpop.permute.xlu0 %339
    %v342 = vadd.f32 %v253, %v340
    %v343 = vmul.f32 %v165, 5.0
    %v344 = vadd.f32 %v343, 1.0
    %vm345 = vcmp.lt.f32.partialorder %v344, %v161
    %v346 = vsel %vm345, %v342, %v253
    %v347 = vsel %vm345, %v342, 0.0
    %v348 = vld [vmem:[#allocation2] sm:$0x30]
    %v349 = vld [vmem:[#allocation2 + $0x8] sm:$0x30]
    %v351 = vsel %vm136, %v346, 0
    %353 = vmatpush.msra.mxu0 0.0
    %354 = vmatpush.msra.mxu0 0.0
    %355 = vmatpush.msra.mxu0 0.0
    %356 = vmatpush.msra.mxu0 0.0
    %357 = vmatpush.msra.mxu0 0.0
    %358 = vmatpush.msra.mxu0 0.0
    %359 = vmatpush.msra.mxu0 0.0
    %360 = vmatpush.msra.mxu0 0.0
    %361 = vmatpush.msra.mxu0 %v154
    %362 = vmatpush.msra.mxu0 %v152
    %363 = vmatpush.msra.mxu0 %v150
    %364 = vmatpush.msra.mxu0 %v148
    %365 = vmatpush.msra.mxu0 %v146
    %366 = vmatpush.msra.mxu0 %v144
    %367 = vmatpush.msra.mxu0 %v142
    %368 = vmatpush.msra.mxu0 %v140
    %369 = vmatmul.f32.gmra.mxu0 %v351
    %v370 = vpop.f32.mrf.mxu0
    %v371 = vadd.f32 %v169, %v370
    %372 = vdwg.mxu0
    %373 = vmatpush.msra.mxu0 0.0
    %374 = vmatpush.msra.mxu0 0.0
    %375 = vmatpush.msra.mxu0 0.0
    %376 = vmatpush.msra.mxu0 0.0
    %377 = vmatpush.msra.mxu0 0.0
    %378 = vmatpush.msra.mxu0 0.0
    %379 = vmatpush.msra.mxu0 0.0
    %380 = vmatpush.msra.mxu0 0.0
    %381 = vmatpush.msra.mxu0 %v155
    %382 = vmatpush.msra.mxu0 %v153
    %383 = vmatpush.msra.mxu0 %v151
    %384 = vmatpush.msra.mxu0 %v149
    %385 = vmatpush.msra.mxu0 %v147
    %386 = vmatpush.msra.mxu0 %v145
    %387 = vmatpush.msra.mxu0 %v143
    %388 = vmatpush.msra.mxu0 %v141
    %389 = vmatmul.f32.gmra.mxu0 %v351
    %v390 = vpop.f32.mrf.mxu0
    %v391 = vadd.f32 %v170, %v390
    %392 = vdwg.mxu0
    %v394 = vrot.slane %v371, 4
    %v396 = vadd.f32 %v348, %v394
    %v397 = vxor.u32 %v396, 2147483648
    %v398 = vmul.f32 %v397, 1.442695
    %v399 = vpow.pop %v398
    %v400 = vadd.f32 %v399, 1.0
    %v401 = vrcp.pop %v400
    %v402 = vmul.f32 %v400, %v401
    %v403 = vsub.f32 1.0, %v402
    %v404 = vmul.f32 %v401, %v403
    %v405 = vadd.f32 %v401, %v404
    %vm406 = vweird.f32 %v400
    %vm407 = vweird.f32 %v401
    %vm408 = vmor %vm406, %vm407
    %v409 = vsel %vm408, %v401, %v405
    %v410 = vand.u32 2147483647, %v400
    %vm411 = vcmp.eq.f32.partialorder %v410, 8.507059e+37
    %v412 = vand.u32 %v400, 2147483648
    %v413 = vor.u32 1.1754944e-38, %v412
    %v414 = vsel %vm411, %v413, %v409
    %v415 = vmul.f32 1.0, %v414
    %v417 = vrot.slane %v391, 4
    %v419 = vmul.f32 %v415, %v417
    %v420 = vadd.f32 %v349, %v419
    %v421 = vtanh.pop %v420
    %v422 = vsub.f32 1.0, %v415
    %v423 = vrot.slane %v346, 4
    %v425 = vsub.f32 %v421, %v423
    %427 = vrot.lane.b32.xlu0 %v425, 64
    %v428 = vpop.permute.xlu0 %427
    %v430 = vmul.f32 %v422, %v428
    %v432 = vrot.slane %v430, 4
    %433 = vrot.lane.b32.xlu0 %v432, 64
    %v434 = vpop.permute.xlu0 %433
    %v436 = vadd.f32 %v346, %v434
    %v437 = vmul.f32 %v165, 3.0
    %v438 = vadd.f32 %v437, 2.0
    %vm439 = vcmp.lt.f32.partialorder %v438, %v161
    %v440 = vsel %vm439, %v436, %v346
    %v441 = vsel %vm439, %v436, 0.0
    %v442 = vld [vmem:[#allocation2] sm:$0xc0]
    %v443 = vld [vmem:[#allocation2 + $0x8] sm:$0xc0]
    %v445 = vsel %vm136, %v440, 0
    %447 = vmatpush.msra.mxu0 0.0
    %448 = vmatpush.msra.mxu0 0.0
    %449 = vmatpush.msra.mxu0 0.0
    %450 = vmatpush.msra.mxu0 0.0
    %451 = vmatpush.msra.mxu0 0.0
    %452 = vmatpush.msra.mxu0 0.0
    %453 = vmatpush.msra.mxu0 0.0
    %454 = vmatpush.msra.mxu0 0.0
    %455 = vmatpush.msra.mxu0 %v154
    %456 = vmatpush.msra.mxu0 %v152
    %457 = vmatpush.msra.mxu0 %v150
    %458 = vmatpush.msra.mxu0 %v148
    %459 = vmatpush.msra.mxu0 %v146
    %460 = vmatpush.msra.mxu0 %v144
    %461 = vmatpush.msra.mxu0 %v142
    %462 = vmatpush.msra.mxu0 %v140
    %463 = vmatmul.f32.gmra.mxu0 %v445
    %v464 = vpop.f32.mrf.mxu0
    %v465 = vadd.f32 %v169, %v464
    %466 = vdwg.mxu0
    %467 = vmatpush.msra.mxu0 0.0
    %468 = vmatpush.msra.mxu0 0.0
    %469 = vmatpush.msra.mxu0 0.0
    %470 = vmatpush.msra.mxu0 0.0
    %471 = vmatpush.msra.mxu0 0.0
    %472 = vmatpush.msra.mxu0 0.0
    %473 = vmatpush.msra.mxu0 0.0
    %474 = vmatpush.msra.mxu0 0.0
    %475 = vmatpush.msra.mxu0 %v155
    %476 = vmatpush.msra.mxu0 %v153
    %477 = vmatpush.msra.mxu0 %v151
    %478 = vmatpush.msra.mxu0 %v149
    %479 = vmatpush.msra.mxu0 %v147
    %480 = vmatpush.msra.mxu0 %v145
    %481 = vmatpush.msra.mxu0 %v143
    %482 = vmatpush.msra.mxu0 %v141
    %483 = vmatmul.f32.gmra.mxu0 %v445
    %v484 = vpop.f32.mrf.mxu0
    %v485 = vadd.f32 %v170, %v484
    %486 = vdwg.mxu0
    %v488 = vrot.slane %v465, 2
    %v490 = vadd.f32 %v442, %v488
    %v491 = vxor.u32 %v490, 2147483648
    %v492 = vmul.f32 %v491, 1.442695
    %v493 = vpow.pop %v492
    %v494 = vadd.f32 %v493, 1.0
    %v495 = vrcp.pop %v494
    %v496 = vmul.f32 %v494, %v495
    %v497 = vsub.f32 1.0, %v496
    %v498 = vmul.f32 %v495, %v497
    %v499 = vadd.f32 %v495, %v498
    %vm500 = vweird.f32 %v494
    %vm501 = vweird.f32 %v495
    %vm502 = vmor %vm500, %vm501
    %v503 = vsel %vm502, %v495, %v499
    %v504 = vand.u32 2147483647, %v494
    %vm505 = vcmp.eq.f32.partialorder %v504, 8.507059e+37
    %v506 = vand.u32 %v494, 2147483648
    %v507 = vor.u32 1.1754944e-38, %v506
    %v508 = vsel %vm505, %v507, %v503
    %v509 = vmul.f32 1.0, %v508
    %v511 = vrot.slane %v485, 2
    %v513 = vmul.f32 %v509, %v511
    %v514 = vadd.f32 %v443, %v513
    %v515 = vtanh.pop %v514
    %v516 = vsub.f32 1.0, %v509
    %v517 = vrot.slane %v440, 2
    %v519 = vsub.f32 %v515, %v517
    %521 = vrot.lane.b32.xlu0 %v519, 64
    %v522 = vpop.permute.xlu0 %521
    %v524 = vmul.f32 %v516, %v522
    %v526 = vrot.slane %v524, 6
    %527 = vrot.lane.b32.xlu0 %v526, 64
    %v528 = vpop.permute.xlu0 %527
    %v530 = vadd.f32 %v440, %v528
    %v531 = vadd.f32 %v165, 3.0
    %vm532 = vcmp.lt.f32.partialorder %v531, %v161
    %v533 = vsel %vm532, %v530, %v440
    %v534 = vsel %vm532, %v530, 0.0
    %v535 = vld [vmem:[#allocation2 + $0x10] sm:$0x3]
    %v536 = vld [vmem:[#allocation2 + $0x18] sm:$0x3]
    %v538 = vsel %vm136, %v533, 0
    %540 = vmatpush.msra.mxu0 0.0
    %541 = vmatpush.msra.mxu0 0.0
    %542 = vmatpush.msra.mxu0 0.0
    %543 = vmatpush.msra.mxu0 0.0
    %544 = vmatpush.msra.mxu0 0.0
    %545 = vmatpush.msra.mxu0 0.0
    %546 = vmatpush.msra.mxu0 0.0
    %547 = vmatpush.msra.mxu0 0.0
    %548 = vmatpush.msra.mxu0 %v154
    %549 = vmatpush.msra.mxu0 %v152
    %550 = vmatpush.msra.mxu0 %v150
    %551 = vmatpush.msra.mxu0 %v148
    %552 = vmatpush.msra.mxu0 %v146
    %553 = vmatpush.msra.mxu0 %v144
    %554 = vmatpush.msra.mxu0 %v142
    %555 = vmatpush.msra.mxu0 %v140
    %556 = vmatmul.f32.gmra.mxu0 %v538
    %v557 = vpop.f32.mrf.mxu0
    %v558 = vadd.f32 %v169, %v557
    %559 = vdwg.mxu0
    %560 = vmatpush.msra.mxu0 0.0
    %561 = vmatpush.msra.mxu0 0.0
    %562 = vmatpush.msra.mxu0 0.0
    %563 = vmatpush.msra.mxu0 0.0
    %564 = vmatpush.msra.mxu0 0.0
    %565 = vmatpush.msra.mxu0 0.0
    %566 = vmatpush.msra.mxu0 0.0
    %567 = vmatpush.msra.mxu0 0.0
    %568 = vmatpush.msra.mxu0 %v155
    %569 = vmatpush.msra.mxu0 %v153
    %570 = vmatpush.msra.mxu0 %v151
    %571 = vmatpush.msra.mxu0 %v149
    %572 = vmatpush.msra.mxu0 %v147
    %573 = vmatpush.msra.mxu0 %v145
    %574 = vmatpush.msra.mxu0 %v143
    %575 = vmatpush.msra.mxu0 %v141
    %576 = vmatmul.f32.gmra.mxu0 %v538
    %v577 = vpop.f32.mrf.mxu0
    %v578 = vadd.f32 %v170, %v577
    %579 = vdwg.mxu0
    %v580 = vadd.f32 %v535, %v558
    %v581 = vxor.u32 %v580, 2147483648
    %v582 = vmul.f32 %v581, 1.442695
    %v583 = vpow.pop %v582
    %v584 = vadd.f32 %v583, 1.0
    %v585 = vrcp.pop %v584
    %v586 = vmul.f32 %v584, %v585
    %v587 = vsub.f32 1.0, %v586
    %v588 = vmul.f32 %v585, %v587
    %v589 = vadd.f32 %v585, %v588
    %vm590 = vweird.f32 %v584
    %vm591 = vweird.f32 %v585
    %vm592 = vmor %vm590, %vm591
    %v593 = vsel %vm592, %v585, %v589
    %v594 = vand.u32 2147483647, %v584
    %vm595 = vcmp.eq.f32.partialorder %v594, 8.507059e+37
    %v596 = vand.u32 %v584, 2147483648
    %v597 = vor.u32 1.1754944e-38, %v596
    %v598 = vsel %vm595, %v597, %v593
    %v599 = vmul.f32 1.0, %v598
    %v600 = vmul.f32 %v599, %v578
    %v601 = vadd.f32 %v536, %v600
    %v602 = vtanh.pop %v601
    %v603 = vsub.f32 1.0, %v599
    %v604 = vsub.f32 %v602, %v533
    %606 = vrot.lane.b32.xlu0 %v604, 64
    %v607 = vpop.permute.xlu0 %606
    %v609 = vmul.f32 %v603, %v607
    %611 = vrot.lane.b32.xlu0 %v609, 64
    %v612 = vpop.permute.xlu0 %611
    %v614 = vadd.f32 %v533, %v612
    %v615 = vmul.f32 %v165, -1.0
    %v616 = vadd.f32 %v615, 4.0
    %vm617 = vcmp.lt.f32.partialorder %v616, %v161
    %v618 = vsel %vm617, %v614, %v533
    %v619 = vsel %vm617, %v614, 0.0
    %v620 = vld [vmem:[#allocation2 + $0x10] sm:$0xc]
    %v621 = vld [vmem:[#allocation2 + $0x18] sm:$0xc]
    %v623 = vsel %vm136, %v618, 0
    %625 = vmatpush.msra.mxu0 0.0
    %626 = vmatpush.msra.mxu0 0.0
    %627 = vmatpush.msra.mxu0 0.0
    %628 = vmatpush.msra.mxu0 0.0
    %629 = vmatpush.msra.mxu0 0.0
    %630 = vmatpush.msra.mxu0 0.0
    %631 = vmatpush.msra.mxu0 0.0
    %632 = vmatpush.msra.mxu0 0.0
    %633 = vmatpush.msra.mxu0 %v154
    %634 = vmatpush.msra.mxu0 %v152
    %635 = vmatpush.msra.mxu0 %v150
    %636 = vmatpush.msra.mxu0 %v148
    %637 = vmatpush.msra.mxu0 %v146
    %638 = vmatpush.msra.mxu0 %v144
    %639 = vmatpush.msra.mxu0 %v142
    %640 = vmatpush.msra.mxu0 %v140
    %641 = vmatmul.f32.gmra.mxu0 %v623
    %v642 = vpop.f32.mrf.mxu0
    %v643 = vadd.f32 %v169, %v642
    %644 = vdwg.mxu0
    %645 = vmatpush.msra.mxu0 0.0
    %646 = vmatpush.msra.mxu0 0.0
    %647 = vmatpush.msra.mxu0 0.0
    %648 = vmatpush.msra.mxu0 0.0
    %649 = vmatpush.msra.mxu0 0.0
    %650 = vmatpush.msra.mxu0 0.0
    %651 = vmatpush.msra.mxu0 0.0
    %652 = vmatpush.msra.mxu0 0.0
    %653 = vmatpush.msra.mxu0 %v155
    %654 = vmatpush.msra.mxu0 %v153
    %655 = vmatpush.msra.mxu0 %v151
    %656 = vmatpush.msra.mxu0 %v149
    %657 = vmatpush.msra.mxu0 %v147
    %658 = vmatpush.msra.mxu0 %v145
    %659 = vmatpush.msra.mxu0 %v143
    %660 = vmatpush.msra.mxu0 %v141
    %661 = vmatmul.f32.gmra.mxu0 %v623
    %v662 = vpop.f32.mrf.mxu0
    %v663 = vadd.f32 %v170, %v662
    %664 = vdwg.mxu0
    %v666 = vrot.slane %v643, 6
    %v668 = vadd.f32 %v620, %v666
    %v669 = vxor.u32 %v668, 2147483648
    %v670 = vmul.f32 %v669, 1.442695
    %v671 = vpow.pop %v670
    %v672 = vadd.f32 %v671, 1.0
    %v673 = vrcp.pop %v672
    %v674 = vmul.f32 %v672, %v673
    %v675 = vsub.f32 1.0, %v674
    %v676 = vmul.f32 %v673, %v675
    %v677 = vadd.f32 %v673, %v676
    %vm678 = vweird.f32 %v672
    %vm679 = vweird.f32 %v673
    %vm680 = vmor %vm678, %vm679
    %v681 = vsel %vm680, %v673, %v677
    %v682 = vand.u32 2147483647, %v672
    %vm683 = vcmp.eq.f32.partialorder %v682, 8.507059e+37
    %v684 = vand.u32 %v672, 2147483648
    %v685 = vor.u32 1.1754944e-38, %v684
    %v686 = vsel %vm683, %v685, %v681
    %v687 = vmul.f32 1.0, %v686
    %v689 = vrot.slane %v663, 6
    %v691 = vmul.f32 %v687, %v689
    %v692 = vadd.f32 %v621, %v691
    %v693 = vtanh.pop %v692
    %v694 = vsub.f32 1.0, %v687
    %v695 = vrot.slane %v618, 6
    %v697 = vsub.f32 %v693, %v695
    %699 = vrot.lane.b32.xlu0 %v697, 64
    %v700 = vpop.permute.xlu0 %699
    %v702 = vmul.f32 %v694, %v700
    %v704 = vrot.slane %v702, 2
    %705 = vrot.lane.b32.xlu0 %v704, 64
    %v706 = vpop.permute.xlu0 %705
    %v708 = vadd.f32 %v618, %v706
    %v709 = vmul.f32 %v165, -3.0
    %v710 = vadd.f32 %v709, 5.0
    %vm711 = vcmp.lt.f32.partialorder %v710, %v161
    %v712 = vsel %vm711, %v708, %v618
    %v713 = vsel %vm711, %v708, 0.0
    %v714 = vld [vmem:[#allocation2 + $0x10] sm:$0x30]
    %v715 = vld [vmem:[#allocation2 + $0x18] sm:$0x30]
    %v717 = vsel %vm136, %v712, 0
    %719 = vmatpush.msra.mxu0 0.0
    %720 = vmatpush.msra.mxu0 0.0
    %721 = vmatpush.msra.mxu0 0.0
    %722 = vmatpush.msra.mxu0 0.0
    %723 = vmatpush.msra.mxu0 0.0
    %724 = vmatpush.msra.mxu0 0.0
    %725 = vmatpush.msra.mxu0 0.0
    %726 = vmatpush.msra.mxu0 0.0
    %727 = vmatpush.msra.mxu0 %v154
    %728 = vmatpush.msra.mxu0 %v152
    %729 = vmatpush.msra.mxu0 %v150
    %730 = vmatpush.msra.mxu0 %v148
    %731 = vmatpush.msra.mxu0 %v146
    %732 = vmatpush.msra.mxu0 %v144
    %733 = vmatpush.msra.mxu0 %v142
    %734 = vmatpush.msra.mxu0 %v140
    %735 = vmatmul.f32.gmra.mxu0 %v717
    %v736 = vpop.f32.mrf.mxu0
    %v737 = vadd.f32 %v169, %v736
    %738 = vdwg.mxu0
    %739 = vmatpush.msra.mxu0 0.0
    %740 = vmatpush.msra.mxu0 0.0
    %741 = vmatpush.msra.mxu0 0.0
    %742 = vmatpush.msra.mxu0 0.0
    %743 = vmatpush.msra.mxu0 0.0
    %744 = vmatpush.msra.mxu0 0.0
    %745 = vmatpush.msra.mxu0 0.0
    %746 = vmatpush.msra.mxu0 0.0
    %747 = vmatpush.msra.mxu0 %v155
    %748 = vmatpush.msra.mxu0 %v153
    %749 = vmatpush.msra.mxu0 %v151
    %750 = vmatpush.msra.mxu0 %v149
    %751 = vmatpush.msra.mxu0 %v147
    %752 = vmatpush.msra.mxu0 %v145
    %753 = vmatpush.msra.mxu0 %v143
    %754 = vmatpush.msra.mxu0 %v141
    %755 = vmatmul.f32.gmra.mxu0 %v717
    %v756 = vpop.f32.mrf.mxu0
    %v757 = vadd.f32 %v170, %v756
    %758 = vdwg.mxu0
    %v760 = vrot.slane %v737, 4
    %v762 = vadd.f32 %v714, %v760
    %v763 = vxor.u32 %v762, 2147483648
    %v764 = vmul.f32 %v763, 1.442695
    %v765 = vpow.pop %v764
    %v766 = vadd.f32 %v765, 1.0
    %v767 = vrcp.pop %v766
    %v768 = vmul.f32 %v766, %v767
    %v769 = vsub.f32 1.0, %v768
    %v770 = vmul.f32 %v767, %v769
    %v771 = vadd.f32 %v767, %v770
    %vm772 = vweird.f32 %v766
    %vm773 = vweird.f32 %v767
    %vm774 = vmor %vm772, %vm773
    %v775 = vsel %vm774, %v767, %v771
    %v776 = vand.u32 2147483647, %v766
    %vm777 = vcmp.eq.f32.partialorder %v776, 8.507059e+37
    %v778 = vand.u32 %v766, 2147483648
    %v779 = vor.u32 1.1754944e-38, %v778
    %v780 = vsel %vm777, %v779, %v775
    %v781 = vmul.f32 1.0, %v780
    %v783 = vrot.slane %v757, 4
    %v785 = vmul.f32 %v781, %v783
    %v786 = vadd.f32 %v715, %v785
    %v787 = vtanh.pop %v786
    %v788 = vsub.f32 1.0, %v781
    %v789 = vrot.slane %v712, 4
    %v791 = vsub.f32 %v787, %v789
    %793 = vrot.lane.b32.xlu0 %v791, 64
    %v794 = vpop.permute.xlu0 %793
    %v796 = vmul.f32 %v788, %v794
    %v798 = vrot.slane %v796, 4
    %799 = vrot.lane.b32.xlu0 %v798, 64
    %v800 = vpop.permute.xlu0 %799
    %v802 = vadd.f32 %v712, %v800
    %v803 = vmul.f32 %v165, -5.0
    %v804 = vadd.f32 %v803, 6.0
    %vm805 = vcmp.lt.f32.partialorder %v804, %v161
    %v806 = vsel %vm805, %v802, %v712
    %v807 = vsel %vm805, %v802, 0.0
    %v808 = vld [vmem:[#allocation2 + $0x10] sm:$0xc0]
    %v809 = vld [vmem:[#allocation2 + $0x18] sm:$0xc0]
    %v811 = vsel %vm136, %v806, 0
    %813 = vmatpush.msra.mxu0 0.0
    %814 = vmatpush.msra.mxu0 0.0
    %815 = vmatpush.msra.mxu0 0.0
    %816 = vmatpush.msra.mxu0 0.0
    %817 = vmatpush.msra.mxu0 0.0
    %818 = vmatpush.msra.mxu0 0.0
    %819 = vmatpush.msra.mxu0 0.0
    %820 = vmatpush.msra.mxu0 0.0
    %821 = vmatpush.msra.mxu0 %v154
    %822 = vmatpush.msra.mxu0 %v152
    %823 = vmatpush.msra.mxu0 %v150
    %824 = vmatpush.msra.mxu0 %v148
    %825 = vmatpush.msra.mxu0 %v146
    %826 = vmatpush.msra.mxu0 %v144
    %827 = vmatpush.msra.mxu0 %v142
    %828 = vmatpush.msra.mxu0 %v140
    %829 = vmatmul.f32.gmra.mxu0 %v811
    %v830 = vpop.f32.mrf.mxu0
    %v831 = vadd.f32 %v169, %v830
    %832 = vdwg.mxu0
    %833 = vmatpush.msra.mxu0 0.0
    %834 = vmatpush.msra.mxu0 0.0
    %835 = vmatpush.msra.mxu0 0.0
    %836 = vmatpush.msra.mxu0 0.0
    %837 = vmatpush.msra.mxu0 0.0
    %838 = vmatpush.msra.mxu0 0.0
    %839 = vmatpush.msra.mxu0 0.0
    %840 = vmatpush.msra.mxu0 0.0
    %841 = vmatpush.msra.mxu0 %v155
    %842 = vmatpush.msra.mxu0 %v153
    %843 = vmatpush.msra.mxu0 %v151
    %844 = vmatpush.msra.mxu0 %v149
    %845 = vmatpush.msra.mxu0 %v147
    %846 = vmatpush.msra.mxu0 %v145
    %847 = vmatpush.msra.mxu0 %v143
    %848 = vmatpush.msra.mxu0 %v141
    %849 = vmatmul.f32.gmra.mxu0 %v811
    %v850 = vpop.f32.mrf.mxu0
    %v851 = vadd.f32 %v170, %v850
    %852 = vdwg.mxu0
    %v854 = vrot.slane %v831, 2
    %v856 = vadd.f32 %v808, %v854
    %v857 = vxor.u32 %v856, 2147483648
    %v858 = vmul.f32 %v857, 1.442695
    %v859 = vpow.pop %v858
    %v860 = vadd.f32 %v859, 1.0
    %v861 = vrcp.pop %v860
    %v862 = vmul.f32 %v860, %v861
    %v863 = vsub.f32 1.0, %v862
    %v864 = vmul.f32 %v861, %v863
    %v865 = vadd.f32 %v861, %v864
    %vm866 = vweird.f32 %v860
    %vm867 = vweird.f32 %v861
    %vm868 = vmor %vm866, %vm867
    %v869 = vsel %vm868, %v861, %v865
    %v870 = vand.u32 2147483647, %v860
    %vm871 = vcmp.eq.f32.partialorder %v870, 8.507059e+37
    %v872 = vand.u32 %v860, 2147483648
    %v873 = vor.u32 1.1754944e-38, %v872
    %v874 = vsel %vm871, %v873, %v869
    %v875 = vmul.f32 1.0, %v874
    %v877 = vrot.slane %v851, 2
    %v879 = vmul.f32 %v875, %v877
    %v880 = vadd.f32 %v809, %v879
    %v881 = vtanh.pop %v880
    %v882 = vsub.f32 1.0, %v875
    %v883 = vrot.slane %v806, 2
    %v885 = vsub.f32 %v881, %v883
    %887 = vrot.lane.b32.xlu0 %v885, 64
    %v888 = vpop.permute.xlu0 %887
    %v890 = vmul.f32 %v882, %v888
    %v892 = vrot.slane %v890, 6
    %893 = vrot.lane.b32.xlu0 %v892, 64
    %v894 = vpop.permute.xlu0 %893
    %v896 = vadd.f32 %v806, %v894
    %v897 = vmul.f32 %v165, -7.0
    %v898 = vadd.f32 %v897, 7.0
    %vm899 = vcmp.lt.f32.partialorder %v898, %v161
    %v900 = vsel %vm899, %v896, %v806
    %v901 = vsel %vm899, %v896, 0.0
    %v903 = vrot.slane %v347, 7
    %v906 = vrot.slane %v441, 6
    %v909 = vrot.slane %v534, 5
    %v912 = vrot.slane %v619, 4
    %v915 = vrot.slane %v713, 3
    %v918 = vrot.slane %v807, 2
    %v921 = vrot.slane %v901, 1
    %vm923 = vcmask 1040384
    %v924 = vsel %vm923, %v253, %v903
    %vm925 = vcmask 1041408
    %v926 = vsel %vm925, %v924, %v906
    %vm927 = vcmask 1042432
    %v928 = vsel %vm927, %v926, %v909
    %vm929 = vcmask 1043456
    %v930 = vsel %vm929, %v928, %v912
    %vm931 = vcmask 1044480
    %v932 = vsel %vm931, %v930, %v915
    %vm933 = vcmask 1045504
    %v934 = vsel %vm933, %v932, %v918
    %vm935 = vcmask 1046528
    %v936 = vsel %vm935, %v934, %v921
    %v937 = vrot.slane %v807, 7
    %v939 = vrot.slane %v713, 6
    %v941 = vrot.slane %v619, 5
    %v943 = vrot.slane %v534, 4
    %v945 = vrot.slane %v441, 3
    %v947 = vrot.slane %v347, 2
    %v949 = vrot.slane %v253, 1
    %v951 = vsel %vm923, %v901, %v937
    %v952 = vsel %vm925, %v951, %v939
    %v953 = vsel %vm927, %v952, %v941
    %v954 = vsel %vm929, %v953, %v943
    %v955 = vsel %vm931, %v954, %v945
    %v956 = vsel %vm933, %v955, %v947
    %v957 = vsel %vm935, %v956, %v949
    %v958 = vrot.slane %v441, 7
    %v960 = vrot.slane %v534, 6
    %v962 = vrot.slane %v713, 4
    %v964 = vrot.slane %v807, 3
    %v966 = vrot.slane %v901, 2
    %v968 = vsel %vm923, %v949, %v347
    %v969 = vsel %vm925, %v968, %v958
    %v970 = vsel %vm927, %v969, %v960
    %v971 = vsel %vm929, %v970, %v941
    %v972 = vsel %vm931, %v971, %v962
    %v973 = vsel %vm933, %v972, %v964
    %v974 = vsel %vm935, %v973, %v966
    %v975 = vrot.slane %v713, 7
    %v977 = vrot.slane %v619, 6
    %v979 = vrot.slane %v441, 4
    %v981 = vrot.slane %v347, 3
    %v983 = vrot.slane %v253, 2
    %v985 = vsel %vm923, %v921, %v807
    %v986 = vsel %vm925, %v985, %v975
    %v987 = vsel %vm927, %v986, %v977
    %v988 = vsel %vm929, %v987, %v909
    %v989 = vsel %vm931, %v988, %v979
    %v990 = vsel %vm933, %v989, %v981
    %v991 = vsel %vm935, %v990, %v983
    %993 = vrot.lane.b32.xlu0 %v974, 64
    %v994 = vpop.permute.xlu0 %993
    %997 = vrot.lane.b32.xlu0 %v991, 64
    %v998 = vpop.permute.xlu0 %997
    %vm1000 = vcmask 261120
    %v1001 = vsel %vm1000, %v936, %v957
    %v1002 = vsel %vm136, %v1001, %v994
    %vm1003 = vcmask 785408
    %v1004 = vsel %vm1003, %v1002, %v998
    %1005 = vst [vmem:[%s7] sm:$0xff] %v1004
    %v1006 = vld [vmem:[%s5] sm:$0xff]
    %v1007 = vld [vmem:[%s5 + $0x8] sm:$0xff]
    %v1008 = vld [vmem:[%s5 + $0x10] sm:$0xff]
    %v1009 = vld [vmem:[%s5 + $0x18] sm:$0xff]
    %v1010 = vld [vmem:[%s5 + $0x20] sm:$0xff]
    %v1011 = vld [vmem:[%s5 + $0x28] sm:$0xff]
    %v1012 = vld [vmem:[%s5 + $0x30] sm:$0xff]
    %v1013 = vld [vmem:[%s5 + $0x38] sm:$0xff]
    %v1014 = vld [vmem:[%s6] sm:$0x1]
    %v1016 = vperm.slane %v1014, 0
    %v1019 = vsel %vm136, %v900, 0
    %1021 = vmatpush.msra.mxu0 0.0
    %1022 = vmatpush.msra.mxu0 0.0
    %1023 = vmatpush.msra.mxu0 0.0
    %1024 = vmatpush.msra.mxu0 0.0
    %1025 = vmatpush.msra.mxu0 0.0
    %1026 = vmatpush.msra.mxu0 0.0
    %1027 = vmatpush.msra.mxu0 0.0
    %1028 = vmatpush.msra.mxu0 0.0
    %1029 = vmatpush.msra.mxu0 %v1013
    %1030 = vmatpush.msra.mxu0 %v1012
    %1031 = vmatpush.msra.mxu0 %v1011
    %1032 = vmatpush.msra.mxu0 %v1010
    %1033 = vmatpush.msra.mxu0 %v1009
    %1034 = vmatpush.msra.mxu0 %v1008
    %1035 = vmatpush.msra.mxu0 %v1007
    %1036 = vmatpush.msra.mxu0 %v1006
    %1037 = vmatmul.f32.gmra.mxu0 %v1019
    %v1038 = vpop.f32.mrf.mxu0
    %v1039 = vadd.f32 %v1016, %v1038
    %1040 = vdwg.mxu0
    %v1041 = vtanh.pop %v1039
    %vm1042 = vcmask 254976
    %1043 = vst.msk [vmem:[#allocation3] sm:$0x3] %vm1042, %v1041
    // Predicated region
    $region30: #{encoder_forward.1} parent=1 // pred_check
      _
    $region31: #{encoder_forward.1} parent=1 // pred_check_branch
      %1045 = sbr.rel (0) target = $region33
    $region32: #{encoder_forward.1} parent=1 // pred_region
      _
    $region33: #{encoder_forward.1} parent=1 // pred_fallthru
      _
    // Predicated region
    $region34: #{encoder_forward.1} parent=1 // pred_check
      _
    $region35: #{encoder_forward.1} parent=1 // pred_check_branch
      %1047 = sbr.rel (0) target = $region37
    $region36: #{encoder_forward.1} parent=1 // pred_region
      %1049 = vsyncadd [#allocation4], 0
      %s1051 = sshll.u32 [#allocation3], 4
      %s1052 = int_to_ptr.vmem [resolvable:$true] %s1051
      %s1053 = sshll.u32 %s8, 4
      %s1054 = int_to_ptr.hbm [resolvable:$true] %s1053
      %1056 = dma.vmem_to_hbm [thread:$0]  %s1052, 32, %s1054, [#allocation4]
    $region37: #{encoder_forward.1} parent=1 // pred_fallthru
      _
    // Predicated region
    $region38: #{encoder_forward.1} parent=1 // pred_check
      _
    $region39: #{encoder_forward.1} parent=1 // pred_check_branch
      %1058 = sbr.rel (0) target = $region41
    $region40: #{encoder_forward.1} parent=1 // pred_region
      _
    $region41: #{encoder_forward.1} parent=1 // pred_fallthru
      _
    // Predicated region
    $region42: #{encoder_forward.1} parent=1 // pred_check
      _
    $region43: #{encoder_forward.1} parent=1 // pred_check_branch
      %1060 = sbr.rel (0) target = $region45
    $region44: #{encoder_forward.1} parent=1 // pred_region
      %1062 = dma.done [#allocation4], 32
    $region45: #{encoder_forward.1} parent=1 // pred_fallthru
      _
    %1063 = vsyncpa [#allocation4], 1

</llo_original>
